<compile_context>
chip_gen: v7x
topology: tpu7x:2x2x1
jax: 0.10.0
libtpu: 0.0.40
codegen_flags: <defaults>
</compile_context>

<pallas_src>
import math

import jax
import jax.numpy as jnp
from jax import lax
from jax.experimental import pallas as pl
from jax.experimental.pallas import tpu as pltpu


def _gelu(x):
    # exact GELU (PyTorch nn.GELU default): 0.5 * x * (1 + erf(x / sqrt(2)))
    return 0.5 * x * (1.0 + lax.erf(x * (1.0 / math.sqrt(2.0))))


def _mm(a, b):
    # bf16 MXU matmul with f32 accumulation (shared by kernel and references).
    return jnp.dot(a.astype(jnp.bfloat16), b.astype(jnp.bfloat16),
                   preferred_element_type=jnp.float32)


def _ru8(n):
    return ((n + 7) // 8) * 8


# ----------------------------------------------------------------------------
# Slab layout (static, shared by host packing and in-kernel carving)
# ----------------------------------------------------------------------------
def make_layout(node_dim, edge_dim, hidden_dim, out_dim):
    D, H, ED = node_dim, hidden_dim, edge_dim
    H1 = H + 1                    # message-MLP layer-1 width + folded attention column
    DP = max(D, out_dim)          # padded reshape output width (carry needs >= D)
    W = max(H1, 3 * D, DP)        # weight-slab lane width
    BW = max(H1, 3 * D, DP)       # bias-slab lane width
    rows = {}
    r = 0
    for name, nr in (("wr", D), ("wc", D), ("we", ED), ("w2", H),
                     ("w3", H), ("wi", D), ("wh", D), ("wre", D)):
        rows[name] = r
        r += _ru8(nr)
    return dict(D=D, H=H, ED=ED, H1=H1, DP=DP, W=W, BW=BW,
                rows=rows, total_rows=r, b_rows=8, out_dim=out_dim)


# ----------------------------------------------------------------------------
# Fused multi-layer kernel
#   grid axis 0 = layer index ("arbitrary", sequential)
#   xs_ref (VMEM scratch) carries the node state between layers
# ----------------------------------------------------------------------------
def make_kernel(layout):
    D = layout["D"]
    H = layout["H"]
    ED = layout["ED"]
    H1 = layout["H1"]
    DP = layout["DP"]
    rows = layout["rows"]
    f32 = jnp.float32
    bf16 = jnp.bfloat16

    def kernel(x_ref, ea_ref, row_ref, col_ref, w_ref, b_ref, out_ref, xs_ref):
        layer = pl.program_id(0)

        @pl.when(layer == 0)
        def _():
            xs_ref[...] = x_ref[...]

        x = xs_ref[...]                              # (N, D) f32 carried node state
        ea = ea_ref[...]                             # (E, ED) f32 edge features
        n_nodes = x.shape[0]
        n_edges = ea.shape[0]

        # ---- carve the per-layer weight/bias slabs (static slices) ----
        wr = w_ref[rows["wr"]:rows["wr"] + D, :H1]        # (D, H+1) bf16
        wc = w_ref[rows["wc"]:rows["wc"] + D, :H1]
        we = w_ref[rows["we"]:rows["we"] + ED, :H1]
        w2 = w_ref[rows["w2"]:rows["w2"] + H, :H]
        w3 = w_ref[rows["w3"]:rows["w3"] + H, :D]
        wi = w_ref[rows["wi"]:rows["wi"] + D, :3 * D]
        wh = w_ref[rows["wh"]:rows["wh"] + D, :3 * D]
        wre = w_ref[rows["wre"]:rows["wre"] + D, :DP]

        bm = b_ref[0:1, :H1]
        b2 = b_ref[1:2, :H]
        b3 = b_ref[2:3, :D]
        bgi = b_ref[3:4, :3 * D]
        bgh = b_ref[4:5, :3 * D]
        bre = b_ref[5:6, :DP]

        # ---- in-kernel gather/scatter one-hots, bf16 (0/1 exact in bf16) ----
        iota_n = lax.broadcasted_iota(jnp.int32, (n_edges, n_nodes), 1)
        row_oh = (row_ref[...] == iota_n).astype(f32).astype(bf16)   # (E, N)
        col_oh = (col_ref[...] == iota_n).astype(f32).astype(bf16)   # (E, N)

        # ---- packed first matmul: cols [0:H] = message-MLP layer-1 preact,
        #      col [H] = folded attention logit ----
        pr = _mm(x, wr)                                   # (N, H+1)
        pc = _mm(x, wc)                                   # (N, H+1)
        pe = _mm(ea, we)                                  # (E, H+1)
        fused = (_mm(row_oh, pr)                          # gather x[row]-projection
                 + _mm(col_oh, pc)                        # gather x[col]-projection
                 + pe + bm)                               # (E, H+1)

        logits = fused[:, H:H1]                           # (E, 1) attention logits
        h1 = _gelu(fused[:, :H])                          # (E, H)

        # softmax over ALL edges (dim=0), matching F.softmax(alpha, dim=0)
        m = jnp.max(logits, axis=0, keepdims=True)
        e = jnp.exp(logits - m)
        alpha = e * pl.reciprocal(jnp.sum(e, axis=0, keepdims=True), approx=True)

        # message MLP tail
        h2 = _gelu(_mm(h1, w2) + b2)                      # (E, H)
        msg = _mm(h2, w3) + b3                            # (E, D)
        wmsg = alpha * msg                                # (E, D)

        # scatter-add over destination nodes (index_add_ over col) on the MXU, bf16
        agg = lax.dot_general(col_oh, wmsg.astype(bf16),
                              (((0,), (0,)), ((), ())),
                              preferred_element_type=f32)  # (N, D)

        # ---- GRUCell(input=agg, hidden=x) with packed gates [r | z | n] ----
        gi = _mm(agg, wi) + bgi                           # (N, 3D)
        gh = _mm(x, wh) + bgh                             # (N, 3D)
        r = jax.nn.sigmoid(gi[:, :D] + gh[:, :D])
        z = jax.nn.sigmoid(gi[:, D:2 * D] + gh[:, D:2 * D])
        n = jnp.tanh(gi[:, 2 * D:] + r * gh[:, 2 * D:])
        h_new = (1.0 - z) * n + z * x                     # (N, D)

        # ---- reshape Linear (zero-padded to DP columns) ----
        out_full = _mm(h_new, wre) + bre                  # (N, DP)
        xs_ref[...] = out_full[:, :D]                     # carry to next layer
        out_ref[...] = out_full                           # last write wins

    return kernel


# ----------------------------------------------------------------------------
# pallas_call wrapper: ONE fused call for all layers
# ----------------------------------------------------------------------------
def gnn_forward(packed, x, edge_index, edge_attr):
    layout = packed["layout"]
    if edge_attr.ndim < 2:
        edge_attr = edge_attr[:, None]
    edge_attr = edge_attr.astype(jnp.float32)
    x = x.astype(jnp.float32)
    row2d = edge_index[0].astype(jnp.int32)[:, None]
    col2d = edge_index[1].astype(jnp.int32)[:, None]

    N, D = x.shape
    E = edge_attr.shape[0]
    L = packed["wslab"].shape[0]
    RW, W = layout["total_rows"], layout["W"]
    BR, BW = layout["b_rows"], layout["BW"]
    DP = layout["DP"]

    out = pl.pallas_call(
        make_kernel(layout),
        out_shape=jax.ShapeDtypeStruct((N, DP), jnp.float32),
        grid_spec=pltpu.PrefetchScalarGridSpec(
            num_scalar_prefetch=0,
            grid=(L,),
            in_specs=[
                pl.BlockSpec((N, D), lambda l: (0, 0)),            # x (fetched once)
                pl.BlockSpec((E, layout["ED"]), lambda l: (0, 0)),  # edge_attr
                pl.BlockSpec((E, 1), lambda l: (0, 0)),             # row
                pl.BlockSpec((E, 1), lambda l: (0, 0)),             # col
                pl.BlockSpec((None, RW, W), lambda l: (l, 0, 0)),   # weight slab (bf16)
                pl.BlockSpec((None, BR, BW), lambda l: (l, 0, 0)),  # bias slab (f32)
            ],
            out_specs=pl.BlockSpec((N, DP), lambda l: (0, 0)),
            scratch_shapes=[pltpu.VMEM((N, D), jnp.float32)],        # carried x
        ),
        compiler_params=pltpu.CompilerParams(
            dimension_semantics=("arbitrary",)),
    )(x, edge_attr, row2d, col2d, packed["wslab"], packed["bslab"])
    return out[:, :layout["out_dim"]]


# ----------------------------------------------------------------------------
# Parameter init (PyTorch-default-style uniform bounds) + one-time folding/packing
# ----------------------------------------------------------------------------
def _init_linear(key, fan_in, fan_out):
    k1, k2 = jax.random.split(key)
    bound = 1.0 / math.sqrt(fan_in)
    w = jax.random.uniform(k1, (fan_in, fan_out), jnp.float32, -bound, bound)
    b = jax.random.uniform(k2, (1, fan_out), jnp.float32, -bound, bound)
    return w, b


def init_params(key, node_dim, edge_dim, hidden_dim, num_layers, out_dim):
    """Raw PyTorch-style parameters (weights pre-transposed to (in, out))."""
    layers = []
    for li in range(num_layers):
        od = out_dim if li == num_layers - 1 else node_dim
        key, *ks = jax.random.split(key, 15)

        wn, bn = _init_linear(ks[0], node_dim, hidden_dim)       # node_proj
        we, be = _init_linear(ks[1], edge_dim, hidden_dim)       # edge_proj
        wa, ba = _init_linear(ks[2], 3 * hidden_dim, 1)          # attention
        war, wac, wae = (wa[:hidden_dim], wa[hidden_dim:2 * hidden_dim],
                         wa[2 * hidden_dim:])

        w1, b1 = _init_linear(ks[3], 2 * node_dim + edge_dim, hidden_dim)
        w1r, w1c, w1e = w1[:node_dim], w1[node_dim:2 * node_dim], w1[2 * node_dim:]
        w2, b2 = _init_linear(ks[4], hidden_dim, hidden_dim)
        w3, b3 = _init_linear(ks[5], hidden_dim, node_dim)

        # GRUCell(node_dim, node_dim): per-gate (D, D) weights, uniform(+-1/sqrt(D))
        wir, bir = _init_linear(ks[6], node_dim, node_dim)
        wiz, biz = _init_linear(ks[7], node_dim, node_dim)
        win, bin_ = _init_linear(ks[8], node_dim, node_dim)
        whr, bhr = _init_linear(ks[9], node_dim, node_dim)
        whz, bhz = _init_linear(ks[10], node_dim, node_dim)
        whn, bhn = _init_linear(ks[11], node_dim, node_dim)

        wre, bre = _init_linear(ks[12], node_dim, od)            # reshape

        layers.append(dict(
            wn=wn, bn=bn, we=we, be=be,
            war=war, wac=wac, wae=wae, ba=ba,
            w1r=w1r, w1c=w1c, w1e=w1e, b1=b1, w2=w2, b2=b2, w3=w3, b3=b3,
            wir=wir, wiz=wiz, win=win, whr=whr, whz=whz, whn=whn,
            bir=bir, biz=biz, bin=bin_, bhr=bhr, bhz=bhz, bhn=bhn,
            wre=wre, bre=bre))
    return {"layers": layers}


def pack_params(raw, layout):
    """Fold attention projections into composed columns (exact algebra), pack every
    layer's weights into one bf16 slab and biases into one f32 slab, and stack the
    slabs along a leading layer axis for the fused multi-layer kernel."""
    bf16 = jnp.bfloat16
    rows = layout["rows"]
    RW, W = layout["total_rows"], layout["W"]
    BR, BW = layout["b_rows"], layout["BW"]

    wslabs, bslabs, per_layer = [], [], []
    for lp in raw["layers"]:
        vr = lp["wn"] @ lp["war"]                    # (D, 1)
        vc = lp["wn"] @ lp["wac"]                    # (D, 1)
        ve = lp["we"] @ lp["wae"]                    # (edge_dim, 1)
        b_att = (lp["bn"] @ lp["war"] + lp["bn"] @ lp["wac"]
                 + lp["be"] @ lp["wae"] + lp["ba"])  # (1, 1)

        wr = jnp.concatenate([lp["w1r"], vr], axis=1).astype(bf16)   # (D, H+1)
        wc = jnp.concatenate([lp["w1c"], vc], axis=1).astype(bf16)   # (D, H+1)
        we = jnp.concatenate([lp["w1e"], ve], axis=1).astype(bf16)   # (edge, H+1)
        bm = jnp.concatenate([lp["b1"], b_att], axis=1)              # (1, H+1)
        w2 = lp["w2"].astype(bf16)
        w3 = lp["w3"].astype(bf16)
        wi = jnp.concatenate([lp["wir"], lp["wiz"], lp["win"]], axis=1).astype(bf16)
        wh = jnp.concatenate([lp["whr"], lp["whz"], lp["whn"]], axis=1).astype(bf16)
        bgi = jnp.concatenate([lp["bir"], lp["biz"], lp["bin"]], axis=1)
        bgh = jnp.concatenate([lp["bhr"], lp["bhz"], lp["bhn"]], axis=1)
        wre = lp["wre"].astype(bf16)
        bre = lp["bre"]

        wslab = jnp.zeros((RW, W), bf16)
        for name, arr in (("wr", wr), ("wc", wc), ("we", we), ("w2", w2),
                          ("w3", w3), ("wi", wi), ("wh", wh), ("wre", wre)):
            r0 = rows[name]
            wslab = wslab.at[r0:r0 + arr.shape[0], :arr.shape[1]].set(arr)

        bslab = jnp.zeros((BR, BW), jnp.float32)
        for i, arr in enumerate((bm, lp["b2"], lp["b3"], bgi, bgh, bre)):
            bslab = bslab.at[i:i + 1, :arr.shape[1]].set(arr)

        wslabs.append(wslab)
        bslabs.append(bslab)
        per_layer.append(dict(wr=wr, wc=wc, we=we, bm=bm, w2=w2, b2=lp["b2"],
                              w3=w3, b3=lp["b3"], wi=wi, wh=wh, bgi=bgi, bgh=bgh,
                              wre=wre, bre=bre))

    return dict(wslab=jnp.stack(wslabs), bslab=jnp.stack(bslabs),
                layers=per_layer, layout=layout)


# ----------------------------------------------------------------------------
# References: (a) precision-matched (same folded params / bf16 matmul + bf16 one-hot
#                 gather/scatter rounding), (b) faithful f32 reference of the module.
# ----------------------------------------------------------------------------
def ref_forward_matched(packed, x, edge_index, edge_attr):
    bf16 = jnp.bfloat16
    f32 = jnp.float32
    if edge_attr.ndim < 2:
        edge_attr = edge_attr[:, None]
    edge_attr = edge_attr.astype(f32)
    row, col = edge_index[0], edge_index[1]
    layout = packed["layout"]
    D, H = layout["D"], layout["H"]
    for lp in packed["layers"]:
        pr = _mm(x, lp["wr"]).astype(bf16).astype(f32)   # gather-operand rounding
        pc = _mm(x, lp["wc"]).astype(bf16).astype(f32)
        pe = _mm(edge_attr, lp["we"])
        fused = pr[row] + pc[col] + pe + lp["bm"]
        logits = fused[:, H:H + 1]
        h1 = _gelu(fused[:, :H])
        alpha = jax.nn.softmax(logits, axis=0)
        h2 = _gelu(_mm(h1, lp["w2"]) + lp["b2"])
        msg = _mm(h2, lp["w3"]) + lp["b3"]
        wmsg = (alpha * msg).astype(bf16).astype(f32)    # scatter-operand rounding
        agg = jnp.zeros((x.shape[0], D), f32).at[col].add(wmsg)
        gi = _mm(agg, lp["wi"]) + lp["bgi"]
        gh = _mm(x, lp["wh"]) + lp["bgh"]
        r = jax.nn.sigmoid(gi[:, :D] + gh[:, :D])
        z = jax.nn.sigmoid(gi[:, D:2 * D] + gh[:, D:2 * D])
        n = jnp.tanh(gi[:, 2 * D:] + r * gh[:, 2 * D:])
        h_new = (1.0 - z) * n + z * x
        x = _mm(h_new, lp["wre"]) + lp["bre"]
    return x


def ref_forward_f32(raw, x, edge_index, edge_attr):
    if edge_attr.ndim < 2:
        edge_attr = edge_attr[:, None]
    edge_attr = edge_attr.astype(jnp.float32)
    row, col = edge_index[0], edge_index[1]
    for lp in raw["layers"]:
        xp = x @ lp["wn"] + lp["bn"]
        ep = edge_attr @ lp["we"] + lp["be"]
        wa = jnp.concatenate([lp["war"], lp["wac"], lp["wae"]], axis=0)
        logits = jnp.concatenate([xp[row], xp[col], ep], axis=1) @ wa + lp["ba"]
        alpha = jax.nn.softmax(logits, axis=0)
        w1 = jnp.concatenate([lp["w1r"], lp["w1c"], lp["w1e"]], axis=0)
        m_in = jnp.concatenate([x[row], x[col], edge_attr], axis=1)
        h1 = _gelu(m_in @ w1 + lp["b1"])
        h2 = _gelu(h1 @ lp["w2"] + lp["b2"])
        msg = h2 @ lp["w3"] + lp["b3"]
        agg = jnp.zeros_like(x).at[col].add(alpha * msg)
        r = jax.nn.sigmoid(agg @ lp["wir"] + lp["bir"] + x @ lp["whr"] + lp["bhr"])
        z = jax.nn.sigmoid(agg @ lp["wiz"] + lp["biz"] + x @ lp["whz"] + lp["bhz"])
        n = jnp.tanh(agg @ lp["win"] + lp["bin"] + r * (x @ lp["whn"] + lp["bhn"]))
        h_new = (1.0 - z) * n + z * x
        x = h_new @ lp["wre"] + lp["bre"]
    return x


if __name__ == "__main__":
    node_dim, edge_dim, hidden_dim, num_layers, out_dim = 16, 4, 32, 2, 8
    N, E = 16, 32

    key = jax.random.PRNGKey(0)
    kx, ke, ki, kp = jax.random.split(key, 4)
    x = jax.random.normal(kx, (N, node_dim), jnp.float32)
    edge_attr = jax.random.normal(ke, (E, edge_dim), jnp.float32)
    edge_index = jax.random.randint(ki, (2, E), 0, N, jnp.int32)

    layout = make_layout(node_dim, edge_dim, hidden_dim, out_dim)
    raw_params = init_params(kp, node_dim, edge_dim, hidden_dim, num_layers, out_dim)
    packed_params = pack_params(raw_params, layout)

    out = jax.block_until_ready(gnn_forward(packed_params, x, edge_index, edge_attr))
    assert out.shape == (N, out_dim)

    # tight check: same folded params + same bf16 matmul / one-hot rounding policy
    ref_m = ref_forward_matched(packed_params, x, edge_index, edge_attr)
    assert jnp.allclose(out, ref_m, atol=5e-3, rtol=5e-3), "mismatch vs matched reference"

    # semantic check vs the original (unfolded, pure f32) module; tolerance covers the
    # intentional bf16-operand matmul policy only.
    ref_f = ref_forward_f32(raw_params, x, edge_index, edge_attr)
    assert jnp.allclose(out, ref_f, atol=5e-2, rtol=5e-2), "mismatch vs f32 module reference"

    print("KERNEL_OK")
</pallas_src>

<mosaic_0001>
module attributes {stable_mosaic.version = 11 : i64} {
  func.func @kernel(%arg0: i32, %arg1: memref<16x16xf32, #tpu.memory_space<vmem>>, %arg2: memref<32x4xf32, #tpu.memory_space<vmem>>, %arg3: memref<32x1xi32, #tpu.memory_space<vmem>>, %arg4: memref<32x1xi32, #tpu.memory_space<vmem>>, %arg5: memref<1x152x48xbf16, #tpu.memory_space<vmem>>, %arg6: memref<1x8x48xf32, #tpu.memory_space<vmem>>, %arg7: memref<16x16xf32, #tpu.memory_space<vmem>>, %arg8: memref<16x16xf32, #tpu.memory_space<vmem>>) attributes {dimension_semantics = [#tpu.dimension_semantics<arbitrary>], iteration_bounds = array<i64: 2>, scalar_prefetch = 0 : i64, scratch_operands = 1 : i64, tpu.core_type = #tpu.core_type<tc>, window_params = [{pipeline_mode = #tpu.pipeline_mode<synchronous>, transform_indices = @transform_0, window_bounds = array<i64: 16, 16>}, {pipeline_mode = #tpu.pipeline_mode<synchronous>, transform_indices = @transform_1, window_bounds = array<i64: 32, 4>}, {pipeline_mode = #tpu.pipeline_mode<synchronous>, transform_indices = @transform_2, window_bounds = array<i64: 32, 1>}, {pipeline_mode = #tpu.pipeline_mode<synchronous>, transform_indices = @transform_3, window_bounds = array<i64: 32, 1>}, {transform_indices = @transform_4, window_bounds = array<i64: 1, 152, 48>}, {transform_indices = @transform_5, window_bounds = array<i64: 1, 8, 48>}, {pipeline_mode = #tpu.pipeline_mode<synchronous>, transform_indices = @transform_6, window_bounds = array<i64: 16, 16>}]} {
    %c0_i32 = arith.constant 0 : i32
    %0 = arith.cmpi eq, %arg0, %c0_i32 : i32
    %1 = arith.extui %0 : i1 to i32
    %c0_i32_0 = arith.constant 0 : i32
    %2 = arith.cmpi ne, %1, %c0_i32_0 : i32
    scf.if %2 {
      %c0_63 = arith.constant 0 : index
      %c0_64 = arith.constant 0 : index
      %140 = vector.load %arg1[%c0_63, %c0_64] : memref<16x16xf32, #tpu.memory_space<vmem>>, vector<16x16xf32>
      %c0_65 = arith.constant 0 : index
      %c0_66 = arith.constant 0 : index
      %141 = vector.load %arg8[%c0_65, %c0_66] : memref<16x16xf32, #tpu.memory_space<vmem>>, vector<16x16xf32>
      tpu.vector_store %arg8[%c0_65, %c0_66], %140 {strides = array<i32>} : memref<16x16xf32, #tpu.memory_space<vmem>>, vector<16x16xf32>,
    } else {
    }
    %c0 = arith.constant 0 : index
    %c0_1 = arith.constant 0 : index
    %3 = vector.load %arg8[%c0, %c0_1] : memref<16x16xf32, #tpu.memory_space<vmem>>, vector<16x16xf32>
    %c0_2 = arith.constant 0 : index
    %c0_3 = arith.constant 0 : index
    %4 = vector.load %arg2[%c0_2, %c0_3] : memref<32x4xf32, #tpu.memory_space<vmem>>, vector<32x4xf32>
    %c0_4 = arith.constant 0 : index
    %c0_5 = arith.constant 0 : index
    %c0_6 = arith.constant 0 : index
    %5 = vector.load %arg5[%c0_4, %c0_5, %c0_6] : memref<1x152x48xbf16, #tpu.memory_space<vmem>>, vector<1x16x33xbf16>
    %6 = vector.shape_cast %5 : vector<1x16x33xbf16> to vector<16x33xbf16>
    %c0_7 = arith.constant 0 : index
    %c16 = arith.constant 16 : index
    %c0_8 = arith.constant 0 : index
    %7 = vector.load %arg5[%c0_7, %c16, %c0_8] : memref<1x152x48xbf16, #tpu.memory_space<vmem>>, vector<1x16x33xbf16>
    %8 = vector.shape_cast %7 : vector<1x16x33xbf16> to vector<16x33xbf16>
    %c0_9 = arith.constant 0 : index
    %c32 = arith.constant 32 : index
    %c0_10 = arith.constant 0 : index
    %9 = vector.load %arg5[%c0_9, %c32, %c0_10] : memref<1x152x48xbf16, #tpu.memory_space<vmem>>, vector<1x4x33xbf16>
    %10 = vector.shape_cast %9 : vector<1x4x33xbf16> to vector<4x33xbf16>
    %c0_11 = arith.constant 0 : index
    %c40 = arith.constant 40 : index
    %c0_12 = arith.constant 0 : index
    %11 = vector.load %arg5[%c0_11, %c40, %c0_12] : memref<1x152x48xbf16, #tpu.memory_space<vmem>>, vector<1x32x32xbf16>
    %12 = vector.shape_cast %11 : vector<1x32x32xbf16> to vector<32x32xbf16>
    %c0_13 = arith.constant 0 : index
    %c72 = arith.constant 72 : index
    %c0_14 = arith.constant 0 : index
    %13 = vector.load %arg5[%c0_13, %c72, %c0_14] : memref<1x152x48xbf16, #tpu.memory_space<vmem>>, vector<1x32x16xbf16>
    %14 = vector.shape_cast %13 : vector<1x32x16xbf16> to vector<32x16xbf16>
    %c0_15 = arith.constant 0 : index
    %c104 = arith.constant 104 : index
    %c0_16 = arith.constant 0 : index
    %15 = vector.load %arg5[%c0_15, %c104, %c0_16] : memref<1x152x48xbf16, #tpu.memory_space<vmem>>, vector<1x16x48xbf16>
    %16 = vector.shape_cast %15 : vector<1x16x48xbf16> to vector<16x48xbf16>
    %c0_17 = arith.constant 0 : index
    %c120 = arith.constant 120 : index
    %c0_18 = arith.constant 0 : index
    %17 = vector.load %arg5[%c0_17, %c120, %c0_18] : memref<1x152x48xbf16, #tpu.memory_space<vmem>>, vector<1x16x48xbf16>
    %18 = vector.shape_cast %17 : vector<1x16x48xbf16> to vector<16x48xbf16>
    %c0_19 = arith.constant 0 : index
    %c136 = arith.constant 136 : index
    %c0_20 = arith.constant 0 : index
    %19 = vector.load %arg5[%c0_19, %c136, %c0_20] : memref<1x152x48xbf16, #tpu.memory_space<vmem>>, vector<1x16x16xbf16>
    %20 = vector.shape_cast %19 : vector<1x16x16xbf16> to vector<16x16xbf16>
    %c0_21 = arith.constant 0 : index
    %c0_22 = arith.constant 0 : index
    %c0_23 = arith.constant 0 : index
    %21 = vector.load %arg6[%c0_21, %c0_22, %c0_23] : memref<1x8x48xf32, #tpu.memory_space<vmem>>, vector<1x1x33xf32>
    %22 = vector.shape_cast %21 : vector<1x1x33xf32> to vector<1x33xf32>
    %c0_24 = arith.constant 0 : index
    %c1 = arith.constant 1 : index
    %c0_25 = arith.constant 0 : index
    %23 = vector.load %arg6[%c0_24, %c1, %c0_25] : memref<1x8x48xf32, #tpu.memory_space<vmem>>, vector<1x1x32xf32>
    %24 = vector.shape_cast %23 : vector<1x1x32xf32> to vector<1x32xf32>
    %c0_26 = arith.constant 0 : index
    %c2 = arith.constant 2 : index
    %c0_27 = arith.constant 0 : index
    %25 = vector.load %arg6[%c0_26, %c2, %c0_27] : memref<1x8x48xf32, #tpu.memory_space<vmem>>, vector<1x1x16xf32>
    %26 = vector.shape_cast %25 : vector<1x1x16xf32> to vector<1x16xf32>
    %c0_28 = arith.constant 0 : index
    %c3 = arith.constant 3 : index
    %c0_29 = arith.constant 0 : index
    %27 = vector.load %arg6[%c0_28, %c3, %c0_29] : memref<1x8x48xf32, #tpu.memory_space<vmem>>, vector<1x1x48xf32>
    %28 = vector.shape_cast %27 : vector<1x1x48xf32> to vector<1x48xf32>
    %c0_30 = arith.constant 0 : index
    %c4 = arith.constant 4 : index
    %c0_31 = arith.constant 0 : index
    %29 = vector.load %arg6[%c0_30, %c4, %c0_31] : memref<1x8x48xf32, #tpu.memory_space<vmem>>, vector<1x1x48xf32>
    %30 = vector.shape_cast %29 : vector<1x1x48xf32> to vector<1x48xf32>
    %c0_32 = arith.constant 0 : index
    %c5 = arith.constant 5 : index
    %c0_33 = arith.constant 0 : index
    %31 = vector.load %arg6[%c0_32, %c5, %c0_33] : memref<1x8x48xf32, #tpu.memory_space<vmem>>, vector<1x1x16xf32>
    %32 = vector.shape_cast %31 : vector<1x1x16xf32> to vector<1x16xf32>
    %33 = tpu.iota {dimensions = array<i32: 1>} : vector<32x16xi32>
    %c0_34 = arith.constant 0 : index
    %c0_35 = arith.constant 0 : index
    %34 = vector.load %arg3[%c0_34, %c0_35] : memref<32x1xi32, #tpu.memory_space<vmem>>, vector<32x1xi32>
    %35 = vector.broadcast %34 : vector<32x1xi32> to vector<32x16xi32>
    %36 = arith.cmpi eq, %35, %33 : vector<32x16xi32>
    %37 = arith.extui %36 : vector<32x16xi1> to vector<32x16xi32>
    %38 = arith.sitofp %37 : vector<32x16xi32> to vector<32x16xf32>
    %39 = arith.truncf %38 : vector<32x16xf32> to vector<32x16xbf16>
    %c0_36 = arith.constant 0 : index
    %c0_37 = arith.constant 0 : index
    %40 = vector.load %arg4[%c0_36, %c0_37] : memref<32x1xi32, #tpu.memory_space<vmem>>, vector<32x1xi32>
    %41 = vector.broadcast %40 : vector<32x1xi32> to vector<32x16xi32>
    %42 = arith.cmpi eq, %41, %33 : vector<32x16xi32>
    %43 = arith.extui %42 : vector<32x16xi1> to vector<32x16xi32>
    %44 = arith.sitofp %43 : vector<32x16xi32> to vector<32x16xf32>
    %45 = arith.truncf %44 : vector<32x16xf32> to vector<32x16xbf16>
    %46 = arith.truncf %3 : vector<16x16xf32> to vector<16x16xbf16>
    %cst = arith.constant dense<0.000000e+00> : vector<16x33xf32>
    %47 = tpu.matmul %46, %6, %cst {dimension_numbers = #tpu.dot_dimension_numbers<[1], [0], [0], [1], [0, 0, 1, 1], [], []>} : vector<16x16xbf16>, vector<16x33xbf16>, vector<16x33xf32> -> vector<16x33xf32>
    %48 = arith.truncf %3 : vector<16x16xf32> to vector<16x16xbf16>
    %cst_38 = arith.constant dense<0.000000e+00> : vector<16x33xf32>
    %49 = tpu.matmul %48, %8, %cst_38 {dimension_numbers = #tpu.dot_dimension_numbers<[1], [0], [0], [1], [0, 0, 1, 1], [], []>} : vector<16x16xbf16>, vector<16x33xbf16>, vector<16x33xf32> -> vector<16x33xf32>
    %50 = arith.truncf %4 : vector<32x4xf32> to vector<32x4xbf16>
    %cst_39 = arith.constant dense<0.000000e+00> : vector<32x33xf32>
    %51 = tpu.matmul %50, %10, %cst_39 {dimension_numbers = #tpu.dot_dimension_numbers<[1], [0], [0], [1], [0, 0, 1, 1], [], []>} : vector<32x4xbf16>, vector<4x33xbf16>, vector<32x33xf32> -> vector<32x33xf32>
    %52 = arith.truncf %47 : vector<16x33xf32> to vector<16x33xbf16>
    %cst_40 = arith.constant dense<0.000000e+00> : vector<32x33xf32>
    %53 = tpu.matmul %39, %52, %cst_40 {dimension_numbers = #tpu.dot_dimension_numbers<[1], [0], [0], [1], [0, 0, 1, 1], [], []>} : vector<32x16xbf16>, vector<16x33xbf16>, vector<32x33xf32> -> vector<32x33xf32>
    %54 = arith.truncf %49 : vector<16x33xf32> to vector<16x33xbf16>
    %cst_41 = arith.constant dense<0.000000e+00> : vector<32x33xf32>
    %55 = tpu.matmul %45, %54, %cst_41 {dimension_numbers = #tpu.dot_dimension_numbers<[1], [0], [0], [1], [0, 0, 1, 1], [], []>} : vector<32x16xbf16>, vector<16x33xbf16>, vector<32x33xf32> -> vector<32x33xf32>
    %56 = arith.addf %53, %55 : vector<32x33xf32>
    %57 = arith.addf %56, %51 : vector<32x33xf32>
    %58 = vector.broadcast %22 : vector<1x33xf32> to vector<32x33xf32>
    %59 = arith.addf %57, %58 : vector<32x33xf32>
    %60 = vector.extract_strided_slice %59 {offsets = [0, 32], sizes = [32, 1], strides = [1, 1]} : vector<32x33xf32> to vector<32x1xf32>
    %61 = vector.extract_strided_slice %59 {offsets = [0, 0], sizes = [32, 32], strides = [1, 1]} : vector<32x33xf32> to vector<32x32xf32>
    %cst_42 = arith.constant 5.000000e-01 : f32
    %62 = vector.broadcast %cst_42 : f32 to vector<32x32xf32>
    %63 = arith.mulf %62, %61 : vector<32x32xf32>
    %cst_43 = arith.constant 0.707106769 : f32
    %64 = vector.broadcast %cst_43 : f32 to vector<32x32xf32>
    %65 = arith.mulf %61, %64 : vector<32x32xf32>
    %66 = math.erf %65 : vector<32x32xf32>
    %cst_44 = arith.constant 1.000000e+00 : f32
    %67 = vector.broadcast %cst_44 : f32 to vector<32x32xf32>
    %68 = arith.addf %67, %66 : vector<32x32xf32>
    %69 = arith.mulf %63, %68 : vector<32x32xf32>
    %cst_45 = arith.constant dense<0xFF800000> : vector<1xf32>
    %70 = vector.multi_reduction <maximumf>, %60, %cst_45 [0] : vector<32x1xf32> to vector<1xf32>
    %71 = vector.shape_cast %70 : vector<1xf32> to vector<1x1xf32>
    %72 = vector.broadcast %71 : vector<1x1xf32> to vector<32x1xf32>
    %73 = arith.subf %60, %72 : vector<32x1xf32>
    %74 = math.exp %73 : vector<32x1xf32>
    %cst_46 = arith.constant dense<0.000000e+00> : vector<1xf32>
    %75 = vector.multi_reduction <add>, %74, %cst_46 [0] : vector<32x1xf32> to vector<1xf32>
    %76 = vector.shape_cast %75 : vector<1xf32> to vector<1x1xf32>
    %77 = tpu.reciprocal %76 {approx = true} : vector<1x1xf32> -> vector<1x1xf32>
    %78 = vector.broadcast %77 : vector<1x1xf32> to vector<32x1xf32>
    %79 = arith.mulf %74, %78 : vector<32x1xf32>
    %80 = arith.truncf %69 : vector<32x32xf32> to vector<32x32xbf16>
    %cst_47 = arith.constant dense<0.000000e+00> : vector<32x32xf32>
    %81 = tpu.matmul %80, %12, %cst_47 {dimension_numbers = #tpu.dot_dimension_numbers<[1], [0], [0], [1], [0, 0, 1, 1], [], []>} : vector<32x32xbf16>, vector<32x32xbf16>, vector<32x32xf32> -> vector<32x32xf32>
    %82 = vector.broadcast %24 : vector<1x32xf32> to vector<32x32xf32>
    %83 = arith.addf %81, %82 : vector<32x32xf32>
    %cst_48 = arith.constant 5.000000e-01 : f32
    %84 = vector.broadcast %cst_48 : f32 to vector<32x32xf32>
    %85 = arith.mulf %84, %83 : vector<32x32xf32>
    %cst_49 = arith.constant 0.707106769 : f32
    %86 = vector.broadcast %cst_49 : f32 to vector<32x32xf32>
    %87 = arith.mulf %83, %86 : vector<32x32xf32>
    %88 = math.erf %87 : vector<32x32xf32>
    %cst_50 = arith.constant 1.000000e+00 : f32
    %89 = vector.broadcast %cst_50 : f32 to vector<32x32xf32>
    %90 = arith.addf %89, %88 : vector<32x32xf32>
    %91 = arith.mulf %85, %90 : vector<32x32xf32>
    %92 = arith.truncf %91 : vector<32x32xf32> to vector<32x32xbf16>
    %cst_51 = arith.constant dense<0.000000e+00> : vector<32x16xf32>
    %93 = tpu.matmul %92, %14, %cst_51 {dimension_numbers = #tpu.dot_dimension_numbers<[1], [0], [0], [1], [0, 0, 1, 1], [], []>} : vector<32x32xbf16>, vector<32x16xbf16>, vector<32x16xf32> -> vector<32x16xf32>
    %94 = vector.broadcast %26 : vector<1x16xf32> to vector<32x16xf32>
    %95 = arith.addf %93, %94 : vector<32x16xf32>
    %96 = vector.broadcast %79 : vector<32x1xf32> to vector<32x16xf32>
    %97 = arith.mulf %96, %95 : vector<32x16xf32>
    %98 = arith.truncf %97 : vector<32x16xf32> to vector<32x16xbf16>
    %cst_52 = arith.constant dense<0.000000e+00> : vector<16x16xf32>
    %99 = tpu.matmul %45, %98, %cst_52 {dimension_numbers = #tpu.dot_dimension_numbers<[0], [0], [1], [1], [0, 1, 1, 1], [], []>} : vector<32x16xbf16>, vector<32x16xbf16>, vector<16x16xf32> -> vector<16x16xf32>
    %100 = arith.truncf %99 : vector<16x16xf32> to vector<16x16xbf16>
    %cst_53 = arith.constant dense<0.000000e+00> : vector<16x48xf32>
    %101 = tpu.matmul %100, %16, %cst_53 {dimension_numbers = #tpu.dot_dimension_numbers<[1], [0], [0], [1], [0, 0, 1, 1], [], []>} : vector<16x16xbf16>, vector<16x48xbf16>, vector<16x48xf32> -> vector<16x48xf32>
    %102 = vector.broadcast %28 : vector<1x48xf32> to vector<16x48xf32>
    %103 = arith.addf %101, %102 : vector<16x48xf32>
    %104 = arith.truncf %3 : vector<16x16xf32> to vector<16x16xbf16>
    %cst_54 = arith.constant dense<0.000000e+00> : vector<16x48xf32>
    %105 = tpu.matmul %104, %18, %cst_54 {dimension_numbers = #tpu.dot_dimension_numbers<[1], [0], [0], [1], [0, 0, 1, 1], [], []>} : vector<16x16xbf16>, vector<16x48xbf16>, vector<16x48xf32> -> vector<16x48xf32>
    %106 = vector.broadcast %30 : vector<1x48xf32> to vector<16x48xf32>
    %107 = arith.addf %105, %106 : vector<16x48xf32>
    %108 = vector.extract_strided_slice %103 {offsets = [0, 0], sizes = [16, 16], strides = [1, 1]} : vector<16x48xf32> to vector<16x16xf32>
    %109 = vector.extract_strided_slice %107 {offsets = [0, 0], sizes = [16, 16], strides = [1, 1]} : vector<16x48xf32> to vector<16x16xf32>
    %110 = arith.addf %108, %109 : vector<16x16xf32>
    %111 = arith.negf %110 : vector<16x16xf32>
    %112 = math.exp %111 : vector<16x16xf32>
    %cst_55 = arith.constant 1.000000e+00 : f32
    %113 = vector.broadcast %cst_55 : f32 to vector<16x16xf32>
    %114 = arith.addf %113, %112 : vector<16x16xf32>
    %115 = arith.divf %113, %114 : vector<16x16xf32>
    %116 = vector.extract_strided_slice %103 {offsets = [0, 16], sizes = [16, 16], strides = [1, 1]} : vector<16x48xf32> to vector<16x16xf32>
    %117 = vector.extract_strided_slice %107 {offsets = [0, 16], sizes = [16, 16], strides = [1, 1]} : vector<16x48xf32> to vector<16x16xf32>
    %118 = arith.addf %116, %117 : vector<16x16xf32>
    %119 = arith.negf %118 : vector<16x16xf32>
    %120 = math.exp %119 : vector<16x16xf32>
    %cst_56 = arith.constant 1.000000e+00 : f32
    %121 = vector.broadcast %cst_56 : f32 to vector<16x16xf32>
    %122 = arith.addf %121, %120 : vector<16x16xf32>
    %123 = arith.divf %121, %122 : vector<16x16xf32>
    %124 = vector.extract_strided_slice %103 {offsets = [0, 32], sizes = [16, 16], strides = [1, 1]} : vector<16x48xf32> to vector<16x16xf32>
    %125 = vector.extract_strided_slice %107 {offsets = [0, 32], sizes = [16, 16], strides = [1, 1]} : vector<16x48xf32> to vector<16x16xf32>
    %126 = arith.mulf %115, %125 : vector<16x16xf32>
    %127 = arith.addf %124, %126 : vector<16x16xf32>
    %128 = math.tanh %127 : vector<16x16xf32>
    %cst_57 = arith.constant 1.000000e+00 : f32
    %129 = vector.broadcast %cst_57 : f32 to vector<16x16xf32>
    %130 = arith.subf %129, %123 : vector<16x16xf32>
    %131 = arith.mulf %130, %128 : vector<16x16xf32>
    %132 = arith.mulf %123, %3 : vector<16x16xf32>
    %133 = arith.addf %131, %132 : vector<16x16xf32>
    %134 = arith.truncf %133 : vector<16x16xf32> to vector<16x16xbf16>
    %cst_58 = arith.constant dense<0.000000e+00> : vector<16x16xf32>
    %135 = tpu.matmul %134, %20, %cst_58 {dimension_numbers = #tpu.dot_dimension_numbers<[1], [0], [0], [1], [0, 0, 1, 1], [], []>} : vector<16x16xbf16>, vector<16x16xbf16>, vector<16x16xf32> -> vector<16x16xf32>
    %136 = vector.broadcast %32 : vector<1x16xf32> to vector<16x16xf32>
    %137 = arith.addf %135, %136 : vector<16x16xf32>
    %c0_59 = arith.constant 0 : index
    %c0_60 = arith.constant 0 : index
    %138 = vector.load %arg8[%c0_59, %c0_60] : memref<16x16xf32, #tpu.memory_space<vmem>>, vector<16x16xf32>
    tpu.vector_store %arg8[%c0_59, %c0_60], %137 {strides = array<i32>} : memref<16x16xf32, #tpu.memory_space<vmem>>, vector<16x16xf32>,
    %c0_61 = arith.constant 0 : index
    %c0_62 = arith.constant 0 : index
    %139 = vector.load %arg7[%c0_61, %c0_62] : memref<16x16xf32, #tpu.memory_space<vmem>>, vector<16x16xf32>
    tpu.vector_store %arg7[%c0_61, %c0_62], %137 {strides = array<i32>} : memref<16x16xf32, #tpu.memory_space<vmem>>, vector<16x16xf32>,
    return
  }
  func.func @transform_0(%arg0: i32) -> (i32, i32) {
    %c0_i32 = arith.constant 0 : i32
    %c0_i32_0 = arith.constant 0 : i32
    %c0_i32_1 = arith.constant 0 : i32
    return %c0_i32, %c0_i32_0 : i32, i32
  }
  func.func @transform_1(%arg0: i32) -> (i32, i32) {
    %c0_i32 = arith.constant 0 : i32
    %c0_i32_0 = arith.constant 0 : i32
    %c0_i32_1 = arith.constant 0 : i32
    return %c0_i32, %c0_i32_0 : i32, i32
  }
  func.func @transform_2(%arg0: i32) -> (i32, i32) {
    %c0_i32 = arith.constant 0 : i32
    %c0_i32_0 = arith.constant 0 : i32
    %c0_i32_1 = arith.constant 0 : i32
    return %c0_i32, %c0_i32_0 : i32, i32
  }
  func.func @transform_3(%arg0: i32) -> (i32, i32) {
    %c0_i32 = arith.constant 0 : i32
    %c0_i32_0 = arith.constant 0 : i32
    %c0_i32_1 = arith.constant 0 : i32
    return %c0_i32, %c0_i32_0 : i32, i32
  }
  func.func @transform_4(%arg0: i32) -> (i32, i32, i32) {
    %c0_i32 = arith.constant 0 : i32
    %c0_i32_0 = arith.constant 0 : i32
    %c0_i32_1 = arith.constant 0 : i32
    return %arg0, %c0_i32, %c0_i32_0 : i32, i32, i32
  }
  func.func @transform_5(%arg0: i32) -> (i32, i32, i32) {
    %c0_i32 = arith.constant 0 : i32
    %c0_i32_0 = arith.constant 0 : i32
    %c0_i32_1 = arith.constant 0 : i32
    return %arg0, %c0_i32, %c0_i32_0 : i32, i32, i32
  }
  func.func @transform_6(%arg0: i32) -> (i32, i32) {
    %c0_i32 = arith.constant 0 : i32
    %c0_i32_0 = arith.constant 0 : i32
    %c0_i32_1 = arith.constant 0 : i32
    return %c0_i32, %c0_i32_0 : i32, i32
  }
}

</mosaic_0001>

<llo_original>
// kernel: tpu_custom_call.1
$region0: #{tpu_custom_call.1}
  #allocation0 [shape = 'u32[]', space=smem, size = 0x4, offset = 0x4, fixed_abs, tag = 'smem constant byte address 0x4 - core index']
  #allocation1 [shape = 'u32[144,128]{1,0:T(1,128)}', space=vmem, size = 0x12000, scoped, tag = 'internal scratch']
  #allocation2 [shape = 'f32[16,16]{1,0:T(8,128)}', space=vmem, size = 0x2000, scoped, tag = 'scratch operand']
  %s0 = inlined_call_operand.vmem [shape: f32[16,16], index: 0, kind: input, shape index: {}]
  %s1 = inlined_call_operand.vmem [shape: f32[32,4], index: 1, kind: input, shape index: {}]
  %s2 = inlined_call_operand.vmem [shape: s32[32,1], index: 2, kind: input, shape index: {}]
  %s3 = inlined_call_operand.vmem [shape: s32[32,1], index: 3, kind: input, shape index: {}]
  %s4 = inlined_call_operand.vmem [shape: bf16[2,152,48], index: 4, kind: input, shape index: {}]
  %s5 = inlined_call_operand.vmem [shape: f32[2,8,48], index: 5, kind: input, shape index: {}]
  %s6 = inlined_call_operand.hbm [shape: f32[16,16], index: 6, kind: output, shape index: {}]
  %s7 = sld [smem:[#allocation0]]
  $region61: #{tpu_custom_call.1} parent=0
    _
  %s9 = ssub.s32 1, %s7
  %s10 = scalar_select 0, %s9, %s7
  $region1: #{tpu_custom_call.1} parent=0
    #allocation3 [shape = 'u8[8192]{0}', space=vmem, size = 0x2000, scoped, tag = 'output window, operand 0, single buffered']
    #allocation4 [shape = 's32[2]{0}', space=sflag, size = 0x8, scoped, tag = 'scoped memory for tpu_custom_call.1']
    %11 = vsyncpa [#allocation4], 0
    loop: start=0, step=1, limit=4
    $region2: #{tpu_custom_call.1} parent=1 // loop_pre_header
      _
    $region3: #{tpu_custom_call.1} parent=1 // loop_header
      %s13 = sphi 0, %s17
      %p14 = scmp.ge.s32.totalorder %s13, 4
      %s21 = sphi 0, %s21
      %s23 = sphi 0, %s21
      %s24 = sphi 0, %s23
      %s38 = sphi 0, %s24
      %s42 = sphi 0, %s42
      %s44 = sphi 0, %s42
      %s45 = sphi 0, %s44
      %s59 = sphi 0, %s45
      %s63 = sphi 0, %s63
      %s65 = sphi 0, %s63
      %s66 = sphi 0, %s65
      %s80 = sphi 0, %s66
      %s84 = sphi 0, %s84
      %s86 = sphi 0, %s84
      %s87 = sphi 0, %s86
      %s101 = sphi 0, %s87
      %s107 = sphi 0, %s109
      %s110 = sphi 0, %s107
      %s111 = sphi 0, %s110
      %s127 = sphi 0, %s111
      %s133 = sphi 0, %s135
      %s136 = sphi 0, %s133
      %s137 = sphi 0, %s136
      %s153 = sphi 0, %s137
      %s157 = sphi 0, %s157
      %s159 = sphi 0, %s157
      %s160 = sphi 0, %s159
      %s174 = sphi 0, %s160
    $region4: #{tpu_custom_call.1} parent=1 // loop_header_branch
      %16 = sbr.rel (%p14) target = $region8
    $region5: #{tpu_custom_call.1} parent=1 // loop_body
      %s18 = ssub.s32 %s13, 1
      %s19 = ssub.s32 %s13, 2
      %s20 = sadd.s32 %s13, 1
      %s22 = sadd.s32 %s21, 1
      %p25 = scmp.eq.s32.totalorder %s13, 1
      %p26 = scmp.ne.s32.totalorder %s21, %s23
      %p27 = scmp.eq.s32.totalorder %s13, 0
      %p28 = por %p26, %p27
      %p29 = scmp.ne.s32.totalorder %s21, %s23
      %p30 = scmp.eq.s32.totalorder %s18, 1
      %p31 = por %p29, %p30
      %p32 = scmp.ne.s32.totalorder %s23, %s24
      %p33 = scmp.eq.s32.totalorder %s18, 0
      %p34 = por %p32, %p33
      %p35 = scmp.ne.s32.totalorder %s23, %s24
      %p36 = scmp.eq.s32.totalorder %s19, 1
      %p37 = por %p35, %p36
      %p39 = scmp.ne.s32.totalorder %s24, %s38
      %p40 = scmp.eq.s32.totalorder %s19, 0
      %p41 = por %p39, %p40
      %s43 = sadd.s32 %s42, 1
      %p46 = scmp.eq.s32.totalorder %s13, 1
      %p47 = scmp.ne.s32.totalorder %s42, %s44
      %p48 = scmp.eq.s32.totalorder %s13, 0
      %p49 = por %p47, %p48
      %p50 = scmp.ne.s32.totalorder %s42, %s44
      %p51 = scmp.eq.s32.totalorder %s18, 1
      %p52 = por %p50, %p51
      %p53 = scmp.ne.s32.totalorder %s44, %s45
      %p54 = scmp.eq.s32.totalorder %s18, 0
      %p55 = por %p53, %p54
      %p56 = scmp.ne.s32.totalorder %s44, %s45
      %p57 = scmp.eq.s32.totalorder %s19, 1
      %p58 = por %p56, %p57
      %p60 = scmp.ne.s32.totalorder %s45, %s59
      %p61 = scmp.eq.s32.totalorder %s19, 0
      %p62 = por %p60, %p61
      %s64 = sadd.s32 %s63, 1
      %p67 = scmp.eq.s32.totalorder %s13, 1
      %p68 = scmp.ne.s32.totalorder %s63, %s65
      %p69 = scmp.eq.s32.totalorder %s13, 0
      %p70 = por %p68, %p69
      %p71 = scmp.ne.s32.totalorder %s63, %s65
      %p72 = scmp.eq.s32.totalorder %s18, 1
      %p73 = por %p71, %p72
      %p74 = scmp.ne.s32.totalorder %s65, %s66
      %p75 = scmp.eq.s32.totalorder %s18, 0
      %p76 = por %p74, %p75
      %p77 = scmp.ne.s32.totalorder %s65, %s66
      %p78 = scmp.eq.s32.totalorder %s19, 1
      %p79 = por %p77, %p78
      %p81 = scmp.ne.s32.totalorder %s66, %s80
      %p82 = scmp.eq.s32.totalorder %s19, 0
      %p83 = por %p81, %p82
      %s85 = sadd.s32 %s84, 1
      %p88 = scmp.eq.s32.totalorder %s13, 1
      %p89 = scmp.ne.s32.totalorder %s84, %s86
      %p90 = scmp.eq.s32.totalorder %s13, 0
      %p91 = por %p89, %p90
      %p92 = scmp.ne.s32.totalorder %s84, %s86
      %p93 = scmp.eq.s32.totalorder %s18, 1
      %p94 = por %p92, %p93
      %p95 = scmp.ne.s32.totalorder %s86, %s87
      %p96 = scmp.eq.s32.totalorder %s18, 0
      %p97 = por %p95, %p96
      %p98 = scmp.ne.s32.totalorder %s86, %s87
      %p99 = scmp.eq.s32.totalorder %s19, 1
      %p100 = por %p98, %p99
      %p102 = scmp.ne.s32.totalorder %s87, %s101
      %p103 = scmp.eq.s32.totalorder %s19, 0
      %p104 = por %p102, %p103
      %s105 = ssub.s32 %s13, %s20
      %p106 = scmp.eq.s32.totalorder %s105, 0
      %s108 = sadd.s32 %s107, 1
      %s109 = scalar_select %p106, %s107, %s108
      %p112 = pneg %p106
      %p113 = scmp.eq.s32.totalorder %s13, 1
      %p114 = por %p112, %p113
      %p115 = scmp.ne.s32.totalorder %s107, %s110
      %p116 = scmp.eq.s32.totalorder %s13, 0
      %p117 = por %p115, %p116
      %p118 = scmp.ne.s32.totalorder %s107, %s110
      %p119 = scmp.eq.s32.totalorder %s18, 1
      %p120 = por %p118, %p119
      %p121 = scmp.ne.s32.totalorder %s110, %s111
      %p122 = scmp.eq.s32.totalorder %s18, 0
      %p123 = por %p121, %p122
      %p124 = scmp.ne.s32.totalorder %s110, %s111
      %p125 = scmp.eq.s32.totalorder %s19, 1
      %p126 = por %p124, %p125
      %p128 = scmp.ne.s32.totalorder %s111, %s127
      %p129 = scmp.eq.s32.totalorder %s19, 0
      %p130 = por %p128, %p129
      %s131 = ssub.s32 %s13, %s20
      %p132 = scmp.eq.s32.totalorder %s131, 0
      %s134 = sadd.s32 %s133, 1
      %s135 = scalar_select %p132, %s133, %s134
      %p138 = pneg %p132
      %p139 = scmp.eq.s32.totalorder %s13, 1
      %p140 = por %p138, %p139
      %p141 = scmp.ne.s32.totalorder %s133, %s136
      %p142 = scmp.eq.s32.totalorder %s13, 0
      %p143 = por %p141, %p142
      %p144 = scmp.ne.s32.totalorder %s133, %s136
      %p145 = scmp.eq.s32.totalorder %s18, 1
      %p146 = por %p144, %p145
      %p147 = scmp.ne.s32.totalorder %s136, %s137
      %p148 = scmp.eq.s32.totalorder %s18, 0
      %p149 = por %p147, %p148
      %p150 = scmp.ne.s32.totalorder %s136, %s137
      %p151 = scmp.eq.s32.totalorder %s19, 1
      %p152 = por %p150, %p151
      %p154 = scmp.ne.s32.totalorder %s137, %s153
      %p155 = scmp.eq.s32.totalorder %s19, 0
      %p156 = por %p154, %p155
      %s158 = sadd.s32 %s157, 1
      %p161 = scmp.eq.s32.totalorder %s13, 1
      %p162 = scmp.ne.s32.totalorder %s157, %s159
      %p163 = scmp.eq.s32.totalorder %s13, 0
      %p164 = por %p162, %p163
      %p165 = scmp.ne.s32.totalorder %s157, %s159
      %p166 = scmp.eq.s32.totalorder %s18, 1
      %p167 = por %p165, %p166
      %p168 = scmp.ne.s32.totalorder %s159, %s160
      %p169 = scmp.eq.s32.totalorder %s18, 0
      %p170 = por %p168, %p169
      %p171 = scmp.ne.s32.totalorder %s159, %s160
      %p172 = scmp.eq.s32.totalorder %s19, 1
      %p173 = por %p171, %p172
      %p175 = scmp.ne.s32.totalorder %s160, %s174
      %p176 = scmp.eq.s32.totalorder %s19, 0
      %p177 = por %p175, %p176
      %p178 = scmp.le.s32.totalorder 1, %s13
      %p179 = scmp.lt.s32.totalorder %s13, 3
      %p180 = pnand %p178, %p179
      %p181 = pneg %p180
      // Predicated region
      $region9: #{tpu_custom_call.1} parent=5 // pred_check
        _
      $region10: #{tpu_custom_call.1} parent=5 // pred_check_branch
        %183 = sbr.rel (%p180) target = $region12
      $region11: #{tpu_custom_call.1} parent=5 // pred_region
        %s184 = ssub.s32 %s13, 1
        // Predicated region
        $region13: #{tpu_custom_call.1} parent=11 // pred_check
          %p185 = pneg %p34
        $region14: #{tpu_custom_call.1} parent=11 // pred_check_branch
          %187 = sbr.rel (%p185) target = $region16
        $region15: #{tpu_custom_call.1} parent=11 // pred_region
          _
        $region16: #{tpu_custom_call.1} parent=11 // pred_fallthru
          _
        // Predicated region
        $region17: #{tpu_custom_call.1} parent=11 // pred_check
          %p188 = pneg %p55
        $region18: #{tpu_custom_call.1} parent=11 // pred_check_branch
          %190 = sbr.rel (%p188) target = $region20
        $region19: #{tpu_custom_call.1} parent=11 // pred_region
          _
        $region20: #{tpu_custom_call.1} parent=11 // pred_fallthru
          _
        // Predicated region
        $region21: #{tpu_custom_call.1} parent=11 // pred_check
          %p191 = pneg %p76
        $region22: #{tpu_custom_call.1} parent=11 // pred_check_branch
          %193 = sbr.rel (%p191) target = $region24
        $region23: #{tpu_custom_call.1} parent=11 // pred_region
          _
        $region24: #{tpu_custom_call.1} parent=11 // pred_fallthru
          _
        // Predicated region
        $region25: #{tpu_custom_call.1} parent=11 // pred_check
          %p194 = pneg %p97
        $region26: #{tpu_custom_call.1} parent=11 // pred_check_branch
          %196 = sbr.rel (%p194) target = $region28
        $region27: #{tpu_custom_call.1} parent=11 // pred_region
          _
        $region28: #{tpu_custom_call.1} parent=11 // pred_fallthru
          _
      $region12: #{tpu_custom_call.1} parent=5 // pred_fallthru
        _
      %p197 = scmp.lt.s32.totalorder %s13, 2
      // Predicated region
      $region29: #{tpu_custom_call.1} parent=5 // pred_check
        %p198 = pneg %p197
      $region30: #{tpu_custom_call.1} parent=5 // pred_check_branch
        %200 = sbr.rel (%p198) target = $region32
      $region31: #{tpu_custom_call.1} parent=5 // pred_region
        // Predicated region
        $region33: #{tpu_custom_call.1} parent=31 // pred_check
          %p201 = pneg %p117
        $region34: #{tpu_custom_call.1} parent=31 // pred_check_branch
          %203 = sbr.rel (%p201) target = $region36
        $region35: #{tpu_custom_call.1} parent=31 // pred_region
          %p204 = scmp.lt.s32.totalorder %s13, 1
          %s205 = scalar_select %p204, %s13, 1
          %s206 = smul.addr %s205, 19
          %s207 = smul.addr %s206, 4
          %s208 = scalar_lea.vmem %s4, %s207
        $region36: #{tpu_custom_call.1} parent=31 // pred_fallthru
          _
        // Predicated region
        $region37: #{tpu_custom_call.1} parent=31 // pred_check
          %p209 = pneg %p143
        $region38: #{tpu_custom_call.1} parent=31 // pred_check_branch
          %211 = sbr.rel (%p209) target = $region40
        $region39: #{tpu_custom_call.1} parent=31 // pred_region
          %p212 = scmp.lt.s32.totalorder %s13, 1
          %s213 = scalar_select %p212, %s13, 1
          %s214 = smul.addr %s213, 8
          %s215 = scalar_lea.vmem %s5, %s214
        $region40: #{tpu_custom_call.1} parent=31 // pred_fallthru
          _
      $region32: #{tpu_custom_call.1} parent=5 // pred_fallthru
        _
      %p216 = scmp.le.s32.totalorder 1, %s13
      %p217 = scmp.lt.s32.totalorder %s13, 3
      %p218 = pnand %p216, %p217
      %p219 = pneg %p218
      // Predicated region
      $region41: #{tpu_custom_call.1} parent=5 // pred_check
        _
      $region42: #{tpu_custom_call.1} parent=5 // pred_check_branch
        %221 = sbr.rel (%p218) target = $region44
      $region43: #{tpu_custom_call.1} parent=5 // pred_region
        %s222 = ssub.s32 %s13, 1
        %p223 = pneg %p34
        %p224 = pneg %p31
        %p225 = pneg %p55
        %p226 = pneg %p52
        %p227 = pneg %p76
        %p228 = pneg %p73
        %p229 = pneg %p97
        %p230 = pneg %p94
        %p231 = scmp.lt.s32.totalorder %s18, 1
        %s232 = scalar_select %p231, %s18, 1
        %s233 = smul.addr %s232, 19
        %s234 = smul.addr %s233, 4
        %s235 = scalar_lea.vmem %s4, %s234
        %p236 = pneg %p123
        %p237 = pneg %p120
        %p238 = scmp.lt.s32.totalorder %s18, 1
        %s239 = scalar_select %p238, %s18, 1
        %s240 = smul.addr %s239, 8
        %s241 = scalar_lea.vmem %s5, %s240
        %p242 = pneg %p149
        %p243 = pneg %p146
        %p244 = pneg %p170
        %p245 = pneg %p167
        %p246 = scmp.lt.s32.totalorder %s18, 1
        %s247 = scalar_select %p246, %s18, 1
        %s248 = smul.addr %s247, 19
        %s249 = smul.addr %s248, 4
        %s250 = scalar_lea.vmem %s4, %s249
        %p251 = scmp.lt.s32.totalorder %s18, 1
        %s252 = scalar_select %p251, %s18, 1
        %s253 = smul.addr %s252, 8
        %s254 = scalar_lea.vmem %s5, %s253
        %p256 = scmp.eq.s32.totalorder %s18, 0
        // Predicated region
        $region45: #{tpu_custom_call.1} parent=43 // pred_check
          %p257 = pneg %p256
        $region46: #{tpu_custom_call.1} parent=43 // pred_check_branch
          %259 = sbr.rel (%p257) target = $region48
        $region47: #{tpu_custom_call.1} parent=43 // pred_region
          %v260 = vld [vmem:[%s0] sm:$0xff]
          %v261 = vld [vmem:[%s0 + $0x8] sm:$0xff]
          %vm262 = vcmask 130048
          %263 = vst.msk [vmem:[#allocation2] sm:$0xff] %vm262, %v260
          %264 = vst.msk [vmem:[#allocation2 + $0x8] sm:$0xff] %vm262, %v261
        $region48: #{tpu_custom_call.1} parent=43 // pred_fallthru
          _
        %v265 = vld [vmem:[#allocation2] sm:$0xff]
        %v266 = vld [vmem:[#allocation2 + $0x8] sm:$0xff]
        %v267 = vld [vmem:[%s1] sm:$0xff]
        %v268 = vld [vmem:[%s1 + $0x8] sm:$0xff]
        %v269 = vld [vmem:[%s1 + $0x10] sm:$0xff]
        %v270 = vld [vmem:[%s1 + $0x18] sm:$0xff]
        %v271 = vld [vmem:[%s250] sm:$0xf]
        %v272 = vld [vmem:[%s250 + $0x4] sm:$0xf]
        %v273 = vld [vmem:[%s250 + $0x8] sm:$0xf]
        %v274 = vld [vmem:[%s250 + $0xc] sm:$0xf]
        %v275 = vld [vmem:[%s250 + $0x10] sm:$0x3]
        %v276 = vld [vmem:[%s250 + $0x14] sm:$0xf]
        %v277 = vld [vmem:[%s250 + $0x18] sm:$0xf]
        %v278 = vld [vmem:[%s250 + $0x1c] sm:$0xf]
        %v279 = vld [vmem:[%s250 + $0x20] sm:$0xf]
        %v280 = vld [vmem:[%s250 + $0x24] sm:$0xf]
        %v281 = vld [vmem:[%s250 + $0x28] sm:$0xf]
        %v282 = vld [vmem:[%s250 + $0x2c] sm:$0xf]
        %v283 = vld [vmem:[%s250 + $0x30] sm:$0xf]
        %v284 = vld [vmem:[%s250 + $0x34] sm:$0xf]
        %v285 = vld [vmem:[%s250 + $0x38] sm:$0xf]
        %v286 = vld [vmem:[%s250 + $0x3c] sm:$0xf]
        %v287 = vld [vmem:[%s250 + $0x40] sm:$0xf]
        %v288 = vld [vmem:[%s250 + $0x44] sm:$0xf]
        %v289 = vld [vmem:[%s250 + $0x48] sm:$0xf]
        %v290 = vld [vmem:[%s254] sm:$0x1]
        %v291 = vld [vmem:[%s254 + $0x1] sm:$0x1]
        %v292 = vld [vmem:[%s254 + $0x2] sm:$0x1]
        %v293 = vld [vmem:[%s254 + $0x3] sm:$0x1]
        %v294 = vld [vmem:[%s254 + $0x4] sm:$0x1]
        %v295 = vld [vmem:[%s254 + $0x5] sm:$0x1]
        %v296 = vlaneseq
        %v297 = vand.u32 %v296, 127
        %v298 = vld [vmem:[%s2] sm:$0xff]
        %v299 = vld [vmem:[%s2 + $0x8] sm:$0xff]
        %v300 = vld [vmem:[%s2 + $0x10] sm:$0xff]
        %v301 = vld [vmem:[%s2 + $0x18] sm:$0xff]
        %302 = vset.pattern.permute.xlu0 0
        %303 = vperm.xlu0 %302, %v298
        %v304 = vpop.permute.xlu0 %303
        %305 = vset.pattern.permute.xlu0 0
        %306 = vperm.xlu0 %305, %v299
        %v307 = vpop.permute.xlu0 %306
        %308 = vset.pattern.permute.xlu0 0
        %309 = vperm.xlu0 %308, %v300
        %v310 = vpop.permute.xlu0 %309
        %311 = vset.pattern.permute.xlu0 0
        %312 = vperm.xlu0 %311, %v301
        %v313 = vpop.permute.xlu0 %312
        %vm314 = vcmp.eq.s32.totalorder %v304, %v297
        %vm315 = vcmp.eq.s32.totalorder %v307, %v297
        %vm316 = vcmp.eq.s32.totalorder %v310, %v297
        %vm317 = vcmp.eq.s32.totalorder %v313, %v297
        %v318 = vsel %vm314, 1, 0
        %v319 = vsel %vm315, 1, 0
        %v320 = vsel %vm316, 1, 0
        %v321 = vsel %vm317, 1, 0
        %v322 = vcvt.s32.f32 %v318
        %v323 = vcvt.s32.f32 %v319
        %v324 = vcvt.s32.f32 %v320
        %v325 = vcvt.s32.f32 %v321
        %v326 = vpack.c.bf16 %v323, %v322
        %v327 = vpack.c.bf16 %v325, %v324
        %v328 = vld [vmem:[%s3] sm:$0xff]
        %v329 = vld [vmem:[%s3 + $0x8] sm:$0xff]
        %v330 = vld [vmem:[%s3 + $0x10] sm:$0xff]
        %v331 = vld [vmem:[%s3 + $0x18] sm:$0xff]
        %332 = vset.pattern.permute.xlu0 0
        %333 = vperm.xlu0 %332, %v328
        %v334 = vpop.permute.xlu0 %333
        %335 = vset.pattern.permute.xlu0 0
        %336 = vperm.xlu0 %335, %v329
        %v337 = vpop.permute.xlu0 %336
        %338 = vset.pattern.permute.xlu0 0
        %339 = vperm.xlu0 %338, %v330
        %v340 = vpop.permute.xlu0 %339
        %341 = vset.pattern.permute.xlu0 0
        %342 = vperm.xlu0 %341, %v331
        %v343 = vpop.permute.xlu0 %342
        %vm344 = vcmp.eq.s32.totalorder %v334, %v297
        %vm345 = vcmp.eq.s32.totalorder %v337, %v297
        %vm346 = vcmp.eq.s32.totalorder %v340, %v297
        %vm347 = vcmp.eq.s32.totalorder %v343, %v297
        %v348 = vsel %vm344, 1, 0
        %v349 = vsel %vm345, 1, 0
        %v350 = vsel %vm346, 1, 0
        %v351 = vsel %vm347, 1, 0
        %v352 = vcvt.s32.f32 %v348
        %v353 = vcvt.s32.f32 %v349
        %v354 = vcvt.s32.f32 %v350
        %v355 = vcvt.s32.f32 %v351
        %v356 = vpack.c.bf16 %v353, %v352
        %v357 = vpack.c.bf16 %v355, %v354
        %v358 = vpack.c.bf16 %v266, %v265
        %v361 = vunpack.c.l.b16 %v271
        %v362 = vunpack.c.l.b16 %v272
        %v363 = vpack.c.b16 %v362, %v361
        %vm365 = vcmask 130048
        %v367 = vsel %vm365, %v358, 0
        %369 = vmatprep.subr.bf16.mxu0 0
        %370 = vmatpush1.bf16.msra.mxu0 %v363
        %371 = vmatprep.subr.bf16.mxu0 0
        %372 = vmatpush1.bf16.msra.mxu0 0
        %373 = vmatprep.subr.bf16.mxu0 0
        %374 = vmatpush1.bf16.msra.mxu0 0
        %375 = vmatprep.subr.bf16.mxu0 0
        %376 = vmatpush1.bf16.msra.mxu0 0
        %377 = vmatprep.subr.bf16.mxu0 0
        %378 = vmatpush1.bf16.msra.mxu0 0
        %379 = vmatprep.subr.bf16.mxu0 0
        %380 = vmatpush1.bf16.msra.mxu0 0
        %381 = vmatprep.subr.bf16.mxu0 0
        %382 = vmatpush1.bf16.msra.mxu0 0
        %383 = vmatprep.subr.bf16.mxu0 0
        %384 = vmatpush1.bf16.msra.mxu0 0
        %385 = vmatprep.subr.bf16.mxu0 0
        %386 = vmatpush1.bf16.msra.mxu0 0
        %387 = vmatprep.subr.bf16.mxu0 0
        %388 = vmatpush1.bf16.msra.mxu0 0
        %389 = vmatprep.subr.bf16.mxu0 0
        %390 = vmatpush1.bf16.msra.mxu0 0
        %391 = vmatprep.subr.bf16.mxu0 0
        %392 = vmatpush1.bf16.msra.mxu0 0
        %393 = vmatprep.subr.bf16.mxu0 0
        %394 = vmatpush1.bf16.msra.mxu0 0
        %395 = vmatprep.subr.bf16.mxu0 0
        %396 = vmatpush1.bf16.msra.mxu0 0
        %397 = vmatprep.subr.bf16.mxu0 0
        %398 = vmatpush1.bf16.msra.mxu0 0
        %399 = vmatprep.subr.bf16.mxu0 0
        %400 = vmatpush1.bf16.msra.mxu0 0
        %401 = vmatprep.mubr.bf16.mxu0 0
        %402 = vmatmul.mubr.bf16.gmra.mrb[0].mxu0 %v367
        %v403 = vpop.f32.mrb[0].mxu0
        %v404 = vadd.f32 0.0, %v403
        %v405 = vpop.f32.mrb[0].mxu0
        %v406 = vpop.f32.mrb[0].mxu0
        %v407 = vadd.f32 0.0, %v406
        %v408 = vpop.f32.mrb[0].mxu0
        %409 = vdwg.mxu0
        %v412 = vunpack.c.l.b16 %v273
        %v413 = vunpack.c.l.b16 %v274
        %v414 = vpack.c.b16 %v413, %v412
        %416 = vmatprep.subr.bf16.mxu0 0
        %417 = vmatpush1.bf16.msra.mxu0 %v414
        %418 = vmatprep.subr.bf16.mxu0 0
        %419 = vmatpush1.bf16.msra.mxu0 0
        %420 = vmatprep.subr.bf16.mxu0 0
        %421 = vmatpush1.bf16.msra.mxu0 0
        %422 = vmatprep.subr.bf16.mxu0 0
        %423 = vmatpush1.bf16.msra.mxu0 0
        %424 = vmatprep.subr.bf16.mxu0 0
        %425 = vmatpush1.bf16.msra.mxu0 0
        %426 = vmatprep.subr.bf16.mxu0 0
        %427 = vmatpush1.bf16.msra.mxu0 0
        %428 = vmatprep.subr.bf16.mxu0 0
        %429 = vmatpush1.bf16.msra.mxu0 0
        %430 = vmatprep.subr.bf16.mxu0 0
        %431 = vmatpush1.bf16.msra.mxu0 0
        %432 = vmatprep.subr.bf16.mxu0 0
        %433 = vmatpush1.bf16.msra.mxu0 0
        %434 = vmatprep.subr.bf16.mxu0 0
        %435 = vmatpush1.bf16.msra.mxu0 0
        %436 = vmatprep.subr.bf16.mxu0 0
        %437 = vmatpush1.bf16.msra.mxu0 0
        %438 = vmatprep.subr.bf16.mxu0 0
        %439 = vmatpush1.bf16.msra.mxu0 0
        %440 = vmatprep.subr.bf16.mxu0 0
        %441 = vmatpush1.bf16.msra.mxu0 0
        %442 = vmatprep.subr.bf16.mxu0 0
        %443 = vmatpush1.bf16.msra.mxu0 0
        %444 = vmatprep.subr.bf16.mxu0 0
        %445 = vmatpush1.bf16.msra.mxu0 0
        %446 = vmatprep.subr.bf16.mxu0 0
        %447 = vmatpush1.bf16.msra.mxu0 0
        %448 = vmatprep.mubr.bf16.mxu0 0
        %449 = vmatmul.mubr.bf16.gmra.mrb[0].mxu0 %v367
        %v450 = vpop.f32.mrb[0].mxu0
        %v451 = vadd.f32 0.0, %v450
        %v452 = vpop.f32.mrb[0].mxu0
        %v453 = vpop.f32.mrb[0].mxu0
        %v454 = vadd.f32 0.0, %v453
        %v455 = vpop.f32.mrb[0].mxu0
        %456 = vdwg.mxu0
        %v457 = vpack.c.bf16 %v268, %v267
        %v458 = vpack.c.bf16 %v270, %v269
        %vm459 = vcmask 31744
        %v461 = vsel %vm459, %v457, 0
        %v464 = vsel %vm459, %v458, 0
        %vm466 = vcmask 1041408
        %v468 = vsel %vm466, %v275, 0
        %470 = vmatprep.subr.bf16.mxu0 0
        %471 = vmatpush1.bf16.msra.mxu0 %v468
        %472 = vmatprep.subr.bf16.mxu0 0
        %473 = vmatpush1.bf16.msra.mxu0 0
        %474 = vmatprep.subr.bf16.mxu0 0
        %475 = vmatpush1.bf16.msra.mxu0 0
        %476 = vmatprep.subr.bf16.mxu0 0
        %477 = vmatpush1.bf16.msra.mxu0 0
        %478 = vmatprep.subr.bf16.mxu0 0
        %479 = vmatpush1.bf16.msra.mxu0 0
        %480 = vmatprep.subr.bf16.mxu0 0
        %481 = vmatpush1.bf16.msra.mxu0 0
        %482 = vmatprep.subr.bf16.mxu0 0
        %483 = vmatpush1.bf16.msra.mxu0 0
        %484 = vmatprep.subr.bf16.mxu0 0
        %485 = vmatpush1.bf16.msra.mxu0 0
        %486 = vmatprep.subr.bf16.mxu0 0
        %487 = vmatpush1.bf16.msra.mxu0 0
        %488 = vmatprep.subr.bf16.mxu0 0
        %489 = vmatpush1.bf16.msra.mxu0 0
        %490 = vmatprep.subr.bf16.mxu0 0
        %491 = vmatpush1.bf16.msra.mxu0 0
        %492 = vmatprep.subr.bf16.mxu0 0
        %493 = vmatpush1.bf16.msra.mxu0 0
        %494 = vmatprep.subr.bf16.mxu0 0
        %495 = vmatpush1.bf16.msra.mxu0 0
        %496 = vmatprep.subr.bf16.mxu0 0
        %497 = vmatpush1.bf16.msra.mxu0 0
        %498 = vmatprep.subr.bf16.mxu0 0
        %499 = vmatpush1.bf16.msra.mxu0 0
        %500 = vmatprep.subr.bf16.mxu0 0
        %501 = vmatpush1.bf16.msra.mxu0 0
        %502 = vmatprep.mubr.bf16.mxu0 0
        %503 = vmatmul.mubr.bf16.gmra.mrb[0].mxu0 %v461
        %v504 = vpop.f32.mrb[0].mxu0
        %v505 = vadd.f32 0.0, %v504
        %v506 = vpop.f32.mrb[0].mxu0
        %v507 = vpop.f32.mrb[0].mxu0
        %v508 = vadd.f32 0.0, %v507
        %v509 = vpop.f32.mrb[0].mxu0
        %510 = vmatprep.mubr.bf16.mxu0 0
        %511 = vmatmul.mubr.bf16.gmra.mrb[0].mxu0 %v464
        %v512 = vpop.f32.mrb[0].mxu0
        %v513 = vadd.f32 0.0, %v512
        %v514 = vpop.f32.mrb[0].mxu0
        %v515 = vpop.f32.mrb[0].mxu0
        %v516 = vadd.f32 0.0, %v515
        %v517 = vpop.f32.mrb[0].mxu0
        %518 = vdwg.mxu0
        %v519 = vpack.c.bf16 %v407, %v404
        %v520 = vpack.c.bf16 %v454, %v451
        %v522 = vsel %vm365, %v356, 0
        %v525 = vsel %vm365, %v357, 0
        %527 = vmatprep.subr.bf16.mxu0 0
        %528 = vmatpush1.bf16.msra.mxu0 %v520
        %529 = vmatprep.subr.bf16.mxu0 0
        %530 = vmatpush1.bf16.msra.mxu0 0
        %531 = vmatprep.subr.bf16.mxu0 0
        %532 = vmatpush1.bf16.msra.mxu0 0
        %533 = vmatprep.subr.bf16.mxu0 0
        %534 = vmatpush1.bf16.msra.mxu0 0
        %535 = vmatprep.subr.bf16.mxu0 0
        %536 = vmatpush1.bf16.msra.mxu0 0
        %537 = vmatprep.subr.bf16.mxu0 0
        %538 = vmatpush1.bf16.msra.mxu0 0
        %539 = vmatprep.subr.bf16.mxu0 0
        %540 = vmatpush1.bf16.msra.mxu0 0
        %541 = vmatprep.subr.bf16.mxu0 0
        %542 = vmatpush1.bf16.msra.mxu0 0
        %543 = vmatprep.subr.bf16.mxu0 0
        %544 = vmatpush1.bf16.msra.mxu0 0
        %545 = vmatprep.subr.bf16.mxu0 0
        %546 = vmatpush1.bf16.msra.mxu0 0
        %547 = vmatprep.subr.bf16.mxu0 0
        %548 = vmatpush1.bf16.msra.mxu0 0
        %549 = vmatprep.subr.bf16.mxu0 0
        %550 = vmatpush1.bf16.msra.mxu0 0
        %551 = vmatprep.subr.bf16.mxu0 0
        %552 = vmatpush1.bf16.msra.mxu0 0
        %553 = vmatprep.subr.bf16.mxu0 0
        %554 = vmatpush1.bf16.msra.mxu0 0
        %555 = vmatprep.subr.bf16.mxu0 0
        %556 = vmatpush1.bf16.msra.mxu0 0
        %557 = vmatprep.subr.bf16.mxu0 0
        %558 = vmatpush1.bf16.msra.mxu0 0
        %559 = vmatprep.mubr.bf16.mxu0 0
        %560 = vmatmul.mubr.bf16.gmra.mrb[0].mxu0 %v522
        %v561 = vpop.f32.mrb[0].mxu0
        %v562 = vadd.f32 0.0, %v561
        %v563 = vpop.f32.mrb[0].mxu0
        %v564 = vpop.f32.mrb[0].mxu0
        %v565 = vadd.f32 0.0, %v564
        %v566 = vpop.f32.mrb[0].mxu0
        %567 = vmatprep.mubr.bf16.mxu0 0
        %568 = vmatmul.mubr.bf16.gmra.mrb[0].mxu0 %v525
        %v569 = vpop.f32.mrb[0].mxu0
        %v570 = vadd.f32 0.0, %v569
        %v571 = vpop.f32.mrb[0].mxu0
        %v572 = vpop.f32.mrb[0].mxu0
        %v573 = vadd.f32 0.0, %v572
        %v574 = vpop.f32.mrb[0].mxu0
        %575 = vdwg.mxu0
        %v577 = vsel %vm365, %v326, 0
        %v580 = vsel %vm365, %v327, 0
        %582 = vmatprep.subr.bf16.mxu0 0
        %583 = vmatpush1.bf16.msra.mxu0 %v519
        %584 = vmatprep.subr.bf16.mxu0 0
        %585 = vmatpush1.bf16.msra.mxu0 0
        %586 = vmatprep.subr.bf16.mxu0 0
        %587 = vmatpush1.bf16.msra.mxu0 0
        %588 = vmatprep.subr.bf16.mxu0 0
        %589 = vmatpush1.bf16.msra.mxu0 0
        %590 = vmatprep.subr.bf16.mxu0 0
        %591 = vmatpush1.bf16.msra.mxu0 0
        %592 = vmatprep.subr.bf16.mxu0 0
        %593 = vmatpush1.bf16.msra.mxu0 0
        %594 = vmatprep.subr.bf16.mxu0 0
        %595 = vmatpush1.bf16.msra.mxu0 0
        %596 = vmatprep.subr.bf16.mxu0 0
        %597 = vmatpush1.bf16.msra.mxu0 0
        %598 = vmatprep.subr.bf16.mxu0 0
        %599 = vmatpush1.bf16.msra.mxu0 0
        %600 = vmatprep.subr.bf16.mxu0 0
        %601 = vmatpush1.bf16.msra.mxu0 0
        %602 = vmatprep.subr.bf16.mxu0 0
        %603 = vmatpush1.bf16.msra.mxu0 0
        %604 = vmatprep.subr.bf16.mxu0 0
        %605 = vmatpush1.bf16.msra.mxu0 0
        %606 = vmatprep.subr.bf16.mxu0 0
        %607 = vmatpush1.bf16.msra.mxu0 0
        %608 = vmatprep.subr.bf16.mxu0 0
        %609 = vmatpush1.bf16.msra.mxu0 0
        %610 = vmatprep.subr.bf16.mxu0 0
        %611 = vmatpush1.bf16.msra.mxu0 0
        %612 = vmatprep.subr.bf16.mxu0 0
        %613 = vmatpush1.bf16.msra.mxu0 0
        %614 = vmatprep.mubr.bf16.mxu0 0
        %615 = vmatmul.mubr.bf16.gmra.mrb[0].mxu0 %v577
        %v616 = vpop.f32.mrb[0].mxu0
        %v617 = vadd.f32 %v562, %v616
        %v618 = vpop.f32.mrb[0].mxu0
        %v619 = vpop.f32.mrb[0].mxu0
        %v620 = vadd.f32 %v565, %v619
        %v621 = vpop.f32.mrb[0].mxu0
        %622 = vmatprep.mubr.bf16.mxu0 0
        %623 = vmatmul.mubr.bf16.gmra.mrb[0].mxu0 %v580
        %v624 = vpop.f32.mrb[0].mxu0
        %v625 = vadd.f32 %v570, %v624
        %v626 = vpop.f32.mrb[0].mxu0
        %v627 = vpop.f32.mrb[0].mxu0
        %v628 = vadd.f32 %v573, %v627
        %v629 = vpop.f32.mrb[0].mxu0
        %630 = vdwg.mxu0
        %v631 = vadd.f32 %v617, %v505
        %v632 = vadd.f32 %v620, %v508
        %v633 = vadd.f32 %v625, %v513
        %v634 = vadd.f32 %v628, %v516
        %v635 = vlaneseq
        %v636 = vshrl.u32 %v635, 7
        %v637 = vsub.s32 0, %v636
        %v638 = vrot.slane %v290, %v637
        %v639 = vadd.f32 %v631, %v638
        %v640 = vadd.f32 %v632, %v638
        %v641 = vadd.f32 %v633, %v638
        %v642 = vadd.f32 %v634, %v638
        %v643 = vmul.f32 %v639, 0.5
        %v644 = vmul.f32 %v640, 0.5
        %v645 = vmul.f32 %v641, 0.5
        %v646 = vmul.f32 %v642, 0.5
        %v647 = vmul.f32 %v639, 0.70710677
        %v648 = vmul.f32 %v640, 0.70710677
        %v649 = vmul.f32 %v641, 0.70710677
        %v650 = vmul.f32 %v642, 0.70710677
        %v651 = verf.f32.pop %v647
        %v652 = verf.f32.pop %v648
        %v653 = verf.f32.pop %v649
        %v654 = verf.f32.pop %v650
        %v655 = vadd.f32 %v651, 1.0
        %v656 = vadd.f32 %v652, 1.0
        %v657 = vadd.f32 %v653, 1.0
        %v658 = vadd.f32 %v654, 1.0
        %v659 = vmul.f32 %v643, %v655
        %v660 = vmul.f32 %v644, %v656
        %v661 = vmul.f32 %v645, %v657
        %v662 = vmul.f32 %v646, %v658
        %vm663 = vcmask 269568
        %v664 = vsel %vm663, %v639, -inf
        %v665 = vsel %vm663, %v640, -inf
        %v666 = vsel %vm663, %v641, -inf
        %v667 = vsel %vm663, %v642, -inf
        %v668 = vmax.f32 %v664, %v665
        %v669 = vmax.f32 %v666, %v667
        %v670 = vmax.f32 %v668, %v669
        %v671 = vrot.slane %v670, 4
        %v672 = vmax.f32 %v670, %v671
        %v673 = vrot.slane %v672, 2
        %v674 = vmax.f32 %v672, %v673
        %v675 = vrot.slane %v674, 1
        %v676 = vmax.f32 %v674, %v675
        %v677 = vsub.f32 %v639, %v676
        %v678 = vsub.f32 %v640, %v676
        %v679 = vsub.f32 %v641, %v676
        %v680 = vsub.f32 %v642, %v676
        %v681 = vmul.f32 %v677, 1.442695
        %v682 = vpow.pop %v681
        %v683 = vmul.f32 %v678, 1.442695
        %v684 = vpow.pop %v683
        %v685 = vmul.f32 %v679, 1.442695
        %v686 = vpow.pop %v685
        %v687 = vmul.f32 %v680, 1.442695
        %v688 = vpow.pop %v687
        %v689 = vsel %vm663, %v682, 0.0
        %v690 = vsel %vm663, %v684, 0.0
        %v691 = vadd.f32 %v689, %v690
        %v692 = vsel %vm663, %v686, 0.0
        %v693 = vadd.f32 %v691, %v692
        %v694 = vsel %vm663, %v688, 0.0
        %v695 = vadd.f32 %v693, %v694
        %v696 = vrot.slane %v695, 4
        %v697 = vadd.f32 %v695, %v696
        %v698 = vrot.slane %v697, 2
        %v699 = vadd.f32 %v697, %v698
        %v700 = vrot.slane %v699, 1
        %v701 = vadd.f32 %v699, %v700
        %v702 = vrcp.pop %v701
        %v703 = vmul.f32 %v682, %v702
        %v704 = vmul.f32 %v684, %v702
        %v705 = vmul.f32 %v686, %v702
        %v706 = vmul.f32 %v688, %v702
        %v707 = vpack.c.bf16 %v660, %v659
        %v708 = vpack.c.bf16 %v662, %v661
        %v709 = vlaneseq
        %v710 = vshrl.u32 %v709, 7
        %v711 = vsub.s32 0, %v710
        %v712 = vrot.slane %v291, %v711
        %v717 = vunpack.c.l.b16 %v276
        %v718 = vunpack.c.l.b16 %v277
        %v719 = vunpack.c.l.b16 %v278
        %v720 = vunpack.c.l.b16 %v279
        %v721 = vpack.c.b16 %v718, %v717
        %v722 = vpack.c.b16 %v720, %v719
        %vm725 = vcmask 261120
        %v727 = vsel %vm725, %v707, 0
        %v730 = vsel %vm725, %v708, 0
        %732 = vmatprep.subr.bf16.mxu0 0
        %733 = vmatpush1.bf16.msra.mxu0 %v721
        %734 = vmatprep.subr.bf16.mxu0 0
        %735 = vmatpush1.bf16.msra.mxu0 %v722
        %736 = vmatprep.subr.bf16.mxu0 0
        %737 = vmatpush1.bf16.msra.mxu0 0
        %738 = vmatprep.subr.bf16.mxu0 0
        %739 = vmatpush1.bf16.msra.mxu0 0
        %740 = vmatprep.subr.bf16.mxu0 0
        %741 = vmatpush1.bf16.msra.mxu0 0
        %742 = vmatprep.subr.bf16.mxu0 0
        %743 = vmatpush1.bf16.msra.mxu0 0
        %744 = vmatprep.subr.bf16.mxu0 0
        %745 = vmatpush1.bf16.msra.mxu0 0
        %746 = vmatprep.subr.bf16.mxu0 0
        %747 = vmatpush1.bf16.msra.mxu0 0
        %748 = vmatprep.subr.bf16.mxu0 0
        %749 = vmatpush1.bf16.msra.mxu0 0
        %750 = vmatprep.subr.bf16.mxu0 0
        %751 = vmatpush1.bf16.msra.mxu0 0
        %752 = vmatprep.subr.bf16.mxu0 0
        %753 = vmatpush1.bf16.msra.mxu0 0
        %754 = vmatprep.subr.bf16.mxu0 0
        %755 = vmatpush1.bf16.msra.mxu0 0
        %756 = vmatprep.subr.bf16.mxu0 0
        %757 = vmatpush1.bf16.msra.mxu0 0
        %758 = vmatprep.subr.bf16.mxu0 0
        %759 = vmatpush1.bf16.msra.mxu0 0
        %760 = vmatprep.subr.bf16.mxu0 0
        %761 = vmatpush1.bf16.msra.mxu0 0
        %762 = vmatprep.subr.bf16.mxu0 0
        %763 = vmatpush1.bf16.msra.mxu0 0
        %764 = vmatprep.mubr.bf16.mxu0 0
        %765 = vmatmul.mubr.bf16.gmra.mrb[0].mxu0 %v727
        %v766 = vpop.f32.mrb[0].mxu0
        %v767 = vadd.f32 %v712, %v766
        %v768 = vpop.f32.mrb[0].mxu0
        %v769 = vpop.f32.mrb[0].mxu0
        %v770 = vadd.f32 %v712, %v769
        %v771 = vpop.f32.mrb[0].mxu0
        %772 = vmatprep.mubr.bf16.mxu0 0
        %773 = vmatmul.mubr.bf16.gmra.mrb[0].mxu0 %v730
        %v774 = vpop.f32.mrb[0].mxu0
        %v775 = vadd.f32 %v712, %v774
        %v776 = vpop.f32.mrb[0].mxu0
        %v777 = vpop.f32.mrb[0].mxu0
        %v778 = vadd.f32 %v712, %v777
        %v779 = vpop.f32.mrb[0].mxu0
        %780 = vdwg.mxu0
        %v781 = vmul.f32 %v767, 0.5
        %v782 = vmul.f32 %v770, 0.5
        %v783 = vmul.f32 %v775, 0.5
        %v784 = vmul.f32 %v778, 0.5
        %v785 = vmul.f32 %v767, 0.70710677
        %v786 = vmul.f32 %v770, 0.70710677
        %v787 = vmul.f32 %v775, 0.70710677
        %v788 = vmul.f32 %v778, 0.70710677
        %v789 = verf.f32.pop %v785
        %v790 = verf.f32.pop %v786
        %v791 = verf.f32.pop %v787
        %v792 = verf.f32.pop %v788
        %v793 = vadd.f32 %v789, 1.0
        %v794 = vadd.f32 %v790, 1.0
        %v795 = vadd.f32 %v791, 1.0
        %v796 = vadd.f32 %v792, 1.0
        %v797 = vmul.f32 %v781, %v793
        %v798 = vmul.f32 %v782, %v794
        %v799 = vmul.f32 %v783, %v795
        %v800 = vmul.f32 %v784, %v796
        %v801 = vpack.c.bf16 %v798, %v797
        %v802 = vpack.c.bf16 %v800, %v799
        %v803 = vlaneseq
        %v804 = vshrl.u32 %v803, 7
        %v805 = vsub.s32 0, %v804
        %v806 = vrot.slane %v292, %v805
        %v811 = vunpack.c.l.b16 %v280
        %v812 = vunpack.c.l.b16 %v281
        %v813 = vunpack.c.l.b16 %v282
        %v814 = vunpack.c.l.b16 %v283
        %v815 = vpack.c.b16 %v812, %v811
        %v816 = vpack.c.b16 %v814, %v813
        %v820 = vsel %vm725, %v801, 0
        %v823 = vsel %vm725, %v802, 0
        %825 = vmatprep.subr.bf16.mxu0 0
        %826 = vmatpush1.bf16.msra.mxu0 %v815
        %827 = vmatprep.subr.bf16.mxu0 0
        %828 = vmatpush1.bf16.msra.mxu0 %v816
        %829 = vmatprep.subr.bf16.mxu0 0
        %830 = vmatpush1.bf16.msra.mxu0 0
        %831 = vmatprep.subr.bf16.mxu0 0
        %832 = vmatpush1.bf16.msra.mxu0 0
        %833 = vmatprep.subr.bf16.mxu0 0
        %834 = vmatpush1.bf16.msra.mxu0 0
        %835 = vmatprep.subr.bf16.mxu0 0
        %836 = vmatpush1.bf16.msra.mxu0 0
        %837 = vmatprep.subr.bf16.mxu0 0
        %838 = vmatpush1.bf16.msra.mxu0 0
        %839 = vmatprep.subr.bf16.mxu0 0
        %840 = vmatpush1.bf16.msra.mxu0 0
        %841 = vmatprep.subr.bf16.mxu0 0
        %842 = vmatpush1.bf16.msra.mxu0 0
        %843 = vmatprep.subr.bf16.mxu0 0
        %844 = vmatpush1.bf16.msra.mxu0 0
        %845 = vmatprep.subr.bf16.mxu0 0
        %846 = vmatpush1.bf16.msra.mxu0 0
        %847 = vmatprep.subr.bf16.mxu0 0
        %848 = vmatpush1.bf16.msra.mxu0 0
        %849 = vmatprep.subr.bf16.mxu0 0
        %850 = vmatpush1.bf16.msra.mxu0 0
        %851 = vmatprep.subr.bf16.mxu0 0
        %852 = vmatpush1.bf16.msra.mxu0 0
        %853 = vmatprep.subr.bf16.mxu0 0
        %854 = vmatpush1.bf16.msra.mxu0 0
        %855 = vmatprep.subr.bf16.mxu0 0
        %856 = vmatpush1.bf16.msra.mxu0 0
        %857 = vmatprep.mubr.bf16.mxu0 0
        %858 = vmatmul.mubr.bf16.gmra.mrb[0].mxu0 %v820
        %v859 = vpop.f32.mrb[0].mxu0
        %v860 = vadd.f32 %v806, %v859
        %v861 = vpop.f32.mrb[0].mxu0
        %v862 = vpop.f32.mrb[0].mxu0
        %v863 = vadd.f32 %v806, %v862
        %v864 = vpop.f32.mrb[0].mxu0
        %865 = vmatprep.mubr.bf16.mxu0 0
        %866 = vmatmul.mubr.bf16.gmra.mrb[0].mxu0 %v823
        %v867 = vpop.f32.mrb[0].mxu0
        %v868 = vadd.f32 %v806, %v867
        %v869 = vpop.f32.mrb[0].mxu0
        %v870 = vpop.f32.mrb[0].mxu0
        %v871 = vadd.f32 %v806, %v870
        %v872 = vpop.f32.mrb[0].mxu0
        %873 = vdwg.mxu0
        %875 = vset.pattern.permute.xlu0 32
        %876 = vperm.xlu0 %875, %v703
        %v877 = vpop.permute.xlu0 %876
        %880 = vset.pattern.permute.xlu0 32
        %881 = vperm.xlu0 %880, %v704
        %v882 = vpop.permute.xlu0 %881
        %885 = vset.pattern.permute.xlu0 32
        %886 = vperm.xlu0 %885, %v705
        %v887 = vpop.permute.xlu0 %886
        %890 = vset.pattern.permute.xlu0 32
        %891 = vperm.xlu0 %890, %v706
        %v892 = vpop.permute.xlu0 %891
        %v894 = vmul.f32 %v877, %v860
        %v895 = vmul.f32 %v882, %v863
        %v896 = vmul.f32 %v887, %v868
        %v897 = vmul.f32 %v892, %v871
        %v898 = vpack.c.bf16 %v895, %v894
        %v899 = vpack.c.bf16 %v897, %v896
        %900 = vxpose.xlu0.c.b16.start [1/8] %v356, 128
        %901 = vxpose.xlu0.c.b16.cont [2/8] %v357, 128
        %902 = vxpose.xlu0.c.b16.cont [3/8] 0, 128
        %903 = vxpose.xlu0.c.b16.cont [4/8] 0, 128
        %904 = vxpose.xlu0.c.b16.cont [5/8] 0, 128
        %905 = vxpose.xlu0.c.b16.cont [6/8] 0, 128
        %906 = vxpose.xlu0.c.b16.cont [7/8] 0, 128
        %907 = vxpose.xlu0.c.b16.end [8/8] 0, 128
        %v908 = vpop.trf.xlu0
        %v909 = vpop.trf.xlu0
        %v910 = vpop.trf.xlu0
        %v911 = vpop.trf.xlu0
        %v912 = vpop.trf.xlu0
        %v913 = vpop.trf.xlu0
        %v914 = vpop.trf.xlu0
        %v915 = vpop.trf.xlu0
        %v917 = vsel %vm725, %v908, 0
        %919 = vmatprep.subr.bf16.mxu0 0
        %920 = vmatpush1.bf16.msra.mxu0 %v898
        %921 = vmatprep.subr.bf16.mxu0 0
        %922 = vmatpush1.bf16.msra.mxu0 %v899
        %923 = vmatprep.subr.bf16.mxu0 0
        %924 = vmatpush1.bf16.msra.mxu0 0
        %925 = vmatprep.subr.bf16.mxu0 0
        %926 = vmatpush1.bf16.msra.mxu0 0
        %927 = vmatprep.subr.bf16.mxu0 0
        %928 = vmatpush1.bf16.msra.mxu0 0
        %929 = vmatprep.subr.bf16.mxu0 0
        %930 = vmatpush1.bf16.msra.mxu0 0
        %931 = vmatprep.subr.bf16.mxu0 0
        %932 = vmatpush1.bf16.msra.mxu0 0
        %933 = vmatprep.subr.bf16.mxu0 0
        %934 = vmatpush1.bf16.msra.mxu0 0
        %935 = vmatprep.subr.bf16.mxu0 0
        %936 = vmatpush1.bf16.msra.mxu0 0
        %937 = vmatprep.subr.bf16.mxu0 0
        %938 = vmatpush1.bf16.msra.mxu0 0
        %939 = vmatprep.subr.bf16.mxu0 0
        %940 = vmatpush1.bf16.msra.mxu0 0
        %941 = vmatprep.subr.bf16.mxu0 0
        %942 = vmatpush1.bf16.msra.mxu0 0
        %943 = vmatprep.subr.bf16.mxu0 0
        %944 = vmatpush1.bf16.msra.mxu0 0
        %945 = vmatprep.subr.bf16.mxu0 0
        %946 = vmatpush1.bf16.msra.mxu0 0
        %947 = vmatprep.subr.bf16.mxu0 0
        %948 = vmatpush1.bf16.msra.mxu0 0
        %949 = vmatprep.subr.bf16.mxu0 0
        %950 = vmatpush1.bf16.msra.mxu0 0
        %951 = vmatprep.mubr.bf16.mxu0 0
        %952 = vmatmul.mubr.bf16.gmra.mrb[0].mxu0 %v917
        %v953 = vpop.f32.mrb[0].mxu0
        %v954 = vadd.f32 0.0, %v953
        %v955 = vpop.f32.mrb[0].mxu0
        %v956 = vpop.f32.mrb[0].mxu0
        %v957 = vadd.f32 0.0, %v956
        %v958 = vpop.f32.mrb[0].mxu0
        %959 = vdwg.mxu0
        %v960 = vpack.c.bf16 %v957, %v954
        %v961 = vlaneseq
        %v962 = vshrl.u32 %v961, 7
        %v963 = vsub.s32 0, %v962
        %v964 = vrot.slane %v293, %v963
        %v967 = vunpack.c.l.b16 %v284
        %v968 = vunpack.c.l.b16 %v285
        %v969 = vpack.c.b16 %v968, %v967
        %v972 = vsel %vm365, %v960, 0
        %974 = vmatprep.subr.bf16.mxu0 0
        %975 = vmatpush1.bf16.msra.mxu0 %v969
        %976 = vmatprep.subr.bf16.mxu0 0
        %977 = vmatpush1.bf16.msra.mxu0 0
        %978 = vmatprep.subr.bf16.mxu0 0
        %979 = vmatpush1.bf16.msra.mxu0 0
        %980 = vmatprep.subr.bf16.mxu0 0
        %981 = vmatpush1.bf16.msra.mxu0 0
        %982 = vmatprep.subr.bf16.mxu0 0
        %983 = vmatpush1.bf16.msra.mxu0 0
        %984 = vmatprep.subr.bf16.mxu0 0
        %985 = vmatpush1.bf16.msra.mxu0 0
        %986 = vmatprep.subr.bf16.mxu0 0
        %987 = vmatpush1.bf16.msra.mxu0 0
        %988 = vmatprep.subr.bf16.mxu0 0
        %989 = vmatpush1.bf16.msra.mxu0 0
        %990 = vmatprep.subr.bf16.mxu0 0
        %991 = vmatpush1.bf16.msra.mxu0 0
        %992 = vmatprep.subr.bf16.mxu0 0
        %993 = vmatpush1.bf16.msra.mxu0 0
        %994 = vmatprep.subr.bf16.mxu0 0
        %995 = vmatpush1.bf16.msra.mxu0 0
        %996 = vmatprep.subr.bf16.mxu0 0
        %997 = vmatpush1.bf16.msra.mxu0 0
        %998 = vmatprep.subr.bf16.mxu0 0
        %999 = vmatpush1.bf16.msra.mxu0 0
        %1000 = vmatprep.subr.bf16.mxu0 0
        %1001 = vmatpush1.bf16.msra.mxu0 0
        %1002 = vmatprep.subr.bf16.mxu0 0
        %1003 = vmatpush1.bf16.msra.mxu0 0
        %1004 = vmatprep.subr.bf16.mxu0 0
        %1005 = vmatpush1.bf16.msra.mxu0 0
        %1006 = vmatprep.mubr.bf16.mxu0 0
        %1007 = vmatmul.mubr.bf16.gmra.mrb[0].mxu0 %v972
        %v1008 = vpop.f32.mrb[0].mxu0
        %v1009 = vadd.f32 %v964, %v1008
        %v1010 = vpop.f32.mrb[0].mxu0
        %v1011 = vpop.f32.mrb[0].mxu0
        %v1012 = vadd.f32 %v964, %v1011
        %v1013 = vpop.f32.mrb[0].mxu0
        %1014 = vdwg.mxu0
        %v1015 = vlaneseq
        %v1016 = vshrl.u32 %v1015, 7
        %v1017 = vsub.s32 0, %v1016
        %v1018 = vrot.slane %v294, %v1017
        %v1021 = vunpack.c.l.b16 %v286
        %v1022 = vunpack.c.l.b16 %v287
        %v1023 = vpack.c.b16 %v1022, %v1021
        %1025 = vmatprep.subr.bf16.mxu0 0
        %1026 = vmatpush1.bf16.msra.mxu0 %v1023
        %1027 = vmatprep.subr.bf16.mxu0 0
        %1028 = vmatpush1.bf16.msra.mxu0 0
        %1029 = vmatprep.subr.bf16.mxu0 0
        %1030 = vmatpush1.bf16.msra.mxu0 0
        %1031 = vmatprep.subr.bf16.mxu0 0
        %1032 = vmatpush1.bf16.msra.mxu0 0
        %1033 = vmatprep.subr.bf16.mxu0 0
        %1034 = vmatpush1.bf16.msra.mxu0 0
        %1035 = vmatprep.subr.bf16.mxu0 0
        %1036 = vmatpush1.bf16.msra.mxu0 0
        %1037 = vmatprep.subr.bf16.mxu0 0
        %1038 = vmatpush1.bf16.msra.mxu0 0
        %1039 = vmatprep.subr.bf16.mxu0 0
        %1040 = vmatpush1.bf16.msra.mxu0 0
        %1041 = vmatprep.subr.bf16.mxu0 0
        %1042 = vmatpush1.bf16.msra.mxu0 0
        %1043 = vmatprep.subr.bf16.mxu0 0
        %1044 = vmatpush1.bf16.msra.mxu0 0
        %1045 = vmatprep.subr.bf16.mxu0 0
        %1046 = vmatpush1.bf16.msra.mxu0 0
        %1047 = vmatprep.subr.bf16.mxu0 0
        %1048 = vmatpush1.bf16.msra.mxu0 0
        %1049 = vmatprep.subr.bf16.mxu0 0
        %1050 = vmatpush1.bf16.msra.mxu0 0
        %1051 = vmatprep.subr.bf16.mxu0 0
        %1052 = vmatpush1.bf16.msra.mxu0 0
        %1053 = vmatprep.subr.bf16.mxu0 0
        %1054 = vmatpush1.bf16.msra.mxu0 0
        %1055 = vmatprep.subr.bf16.mxu0 0
        %1056 = vmatpush1.bf16.msra.mxu0 0
        %1057 = vmatprep.mubr.bf16.mxu0 0
        %1058 = vmatmul.mubr.bf16.gmra.mrb[0].mxu0 %v367
        %v1059 = vpop.f32.mrb[0].mxu0
        %v1060 = vadd.f32 %v1018, %v1059
        %v1061 = vpop.f32.mrb[0].mxu0
        %v1062 = vpop.f32.mrb[0].mxu0
        %v1063 = vadd.f32 %v1018, %v1062
        %v1064 = vpop.f32.mrb[0].mxu0
        %1065 = vdwg.mxu0
        %v1066 = vadd.f32 %v1009, %v1060
        %v1067 = vadd.f32 %v1012, %v1063
        %v1068 = vxor.u32 %v1066, 2147483648
        %v1069 = vxor.u32 %v1067, 2147483648
        %v1070 = vmul.f32 %v1068, 1.442695
        %v1071 = vpow.pop %v1070
        %v1072 = vmul.f32 %v1069, 1.442695
        %v1073 = vpow.pop %v1072
        %v1074 = vadd.f32 %v1071, 1.0
        %v1075 = vadd.f32 %v1073, 1.0
        %v1076 = vrcp.pop %v1074
        %v1077 = vmul.f32 1.0, %v1076
        %v1078 = vrcp.pop %v1075
        %v1079 = vmul.f32 1.0, %v1078
        %1082 = vrot.lane.b32.xlu0 %v1060, 96
        %v1083 = vpop.permute.xlu0 %1082
        %1084 = vrot.lane.b32.xlu0 %v1063, 96
        %v1085 = vpop.permute.xlu0 %1084
        %v1088 = vmul.f32 %v1077, %v1083
        %v1089 = vmul.f32 %v1079, %v1085
        %1092 = vrot.lane.b32.xlu0 %v1088, 32
        %v1093 = vpop.permute.xlu0 %1092
        %1094 = vrot.lane.b32.xlu0 %v1089, 32
        %v1095 = vpop.permute.xlu0 %1094
        %v1098 = vadd.f32 %v1009, %v1093
        %v1099 = vadd.f32 %v1012, %v1095
        %v1100 = vtanh.pop %v1098
        %v1101 = vtanh.pop %v1099
        %v1102 = vsub.f32 1.0, %v1077
        %v1103 = vsub.f32 1.0, %v1079
        %1106 = vrot.lane.b32.xlu0 %v1100, 112
        %v1107 = vpop.permute.xlu0 %1106
        %1108 = vrot.lane.b32.xlu0 %v1101, 112
        %v1109 = vpop.permute.xlu0 %1108
        %v1112 = vmul.f32 %v1102, %v1107
        %v1113 = vmul.f32 %v1103, %v1109
        %1116 = vrot.lane.b32.xlu0 %v265, 16
        %v1117 = vpop.permute.xlu0 %1116
        %1118 = vrot.lane.b32.xlu0 %v266, 16
        %v1119 = vpop.permute.xlu0 %1118
        %v1122 = vmul.f32 %v1077, %v1117
        %v1123 = vmul.f32 %v1079, %v1119
        %v1124 = vadd.f32 %v1112, %v1122
        %v1125 = vadd.f32 %v1113, %v1123
        %v1126 = vpack.c.bf16 %v1125, %v1124
        %v1127 = vlaneseq
        %v1128 = vshrl.u32 %v1127, 7
        %v1129 = vsub.s32 0, %v1128
        %v1130 = vrot.slane %v295, %v1129
        %1132 = vrot.lane.b32.xlu0 %v1126, 112
        %v1133 = vpop.permute.xlu0 %1132
        %v1136 = vunpack.c.l.b16 %v288
        %v1137 = vunpack.c.l.b16 %v289
        %v1138 = vpack.c.b16 %v1137, %v1136
        %v1141 = vsel %vm365, %v1133, 0
        %1143 = vmatprep.subr.bf16.mxu0 0
        %1144 = vmatpush1.bf16.msra.mxu0 %v1138
        %1145 = vmatprep.subr.bf16.mxu0 0
        %1146 = vmatpush1.bf16.msra.mxu0 0
        %1147 = vmatprep.subr.bf16.mxu0 0
        %1148 = vmatpush1.bf16.msra.mxu0 0
        %1149 = vmatprep.subr.bf16.mxu0 0
        %1150 = vmatpush1.bf16.msra.mxu0 0
        %1151 = vmatprep.subr.bf16.mxu0 0
        %1152 = vmatpush1.bf16.msra.mxu0 0
        %1153 = vmatprep.subr.bf16.mxu0 0
        %1154 = vmatpush1.bf16.msra.mxu0 0
        %1155 = vmatprep.subr.bf16.mxu0 0
        %1156 = vmatpush1.bf16.msra.mxu0 0
        %1157 = vmatprep.subr.bf16.mxu0 0
        %1158 = vmatpush1.bf16.msra.mxu0 0
        %1159 = vmatprep.subr.bf16.mxu0 0
        %1160 = vmatpush1.bf16.msra.mxu0 0
        %1161 = vmatprep.subr.bf16.mxu0 0
        %1162 = vmatpush1.bf16.msra.mxu0 0
        %1163 = vmatprep.subr.bf16.mxu0 0
        %1164 = vmatpush1.bf16.msra.mxu0 0
        %1165 = vmatprep.subr.bf16.mxu0 0
        %1166 = vmatpush1.bf16.msra.mxu0 0
        %1167 = vmatprep.subr.bf16.mxu0 0
        %1168 = vmatpush1.bf16.msra.mxu0 0
        %1169 = vmatprep.subr.bf16.mxu0 0
        %1170 = vmatpush1.bf16.msra.mxu0 0
        %1171 = vmatprep.subr.bf16.mxu0 0
        %1172 = vmatpush1.bf16.msra.mxu0 0
        %1173 = vmatprep.subr.bf16.mxu0 0
        %1174 = vmatpush1.bf16.msra.mxu0 0
        %1175 = vmatprep.mubr.bf16.mxu0 0
        %1176 = vmatmul.mubr.bf16.gmra.mrb[0].mxu0 %v1141
        %v1177 = vpop.f32.mrb[0].mxu0
        %v1178 = vadd.f32 %v1130, %v1177
        %v1179 = vpop.f32.mrb[0].mxu0
        %v1180 = vpop.f32.mrb[0].mxu0
        %v1181 = vadd.f32 %v1130, %v1180
        %v1182 = vpop.f32.mrb[0].mxu0
        %1183 = vdwg.mxu0
        %1184 = vst.msk [vmem:[#allocation2] sm:$0xff] %vm365, %v1178
        %1185 = vst.msk [vmem:[#allocation2 + $0x8] sm:$0xff] %vm365, %v1181
        %1186 = vst.msk [vmem:[#allocation3] sm:$0xff] %vm365, %v1178
        %1187 = vst.msk [vmem:[#allocation3 + $0x8] sm:$0xff] %vm365, %v1181
        // Predicated region
        $region49: #{tpu_custom_call.1} parent=43 // pred_check
          %p1188 = pneg %p167
        $region50: #{tpu_custom_call.1} parent=43 // pred_check_branch
          %1190 = sbr.rel (%p1188) target = $region52
        $region51: #{tpu_custom_call.1} parent=43 // pred_region
          %s1192 = ssub.s32 256, 256
          %1193 = vsyncadd [#allocation4], %s1192
          %s1194 = sshll.u32 [#allocation3], 4
          %s1195 = int_to_ptr.vmem [resolvable:$true] %s1194
          %1200 = dma.vmem_to_hbm [thread:$0]  %s1195, 256, %s6, [#allocation4], 128, 128, 8
        $region52: #{tpu_custom_call.1} parent=43 // pred_fallthru
          _
        // Predicated region
        $region53: #{tpu_custom_call.1} parent=43 // pred_check
          %p1201 = pneg %p167
        $region54: #{tpu_custom_call.1} parent=43 // pred_check_branch
          %1203 = sbr.rel (%p1201) target = $region56
        $region55: #{tpu_custom_call.1} parent=43 // pred_region
          %1204 = dma.done [#allocation4], 256
        $region56: #{tpu_custom_call.1} parent=43 // pred_fallthru
          _
      $region44: #{tpu_custom_call.1} parent=5 // pred_fallthru
        _
      %p1205 = scmp.le.s32.totalorder 2, %s13
      // Predicated region
      $region57: #{tpu_custom_call.1} parent=5 // pred_check
        %p1206 = pneg %p1205
      $region58: #{tpu_custom_call.1} parent=5 // pred_check_branch
        %1208 = sbr.rel (%p1206) target = $region60
      $region59: #{tpu_custom_call.1} parent=5 // pred_region
        %s1209 = ssub.s32 %s13, 2
      $region60: #{tpu_custom_call.1} parent=5 // pred_fallthru
        _
    $region6: #{tpu_custom_call.1} parent=1 // loop_footer
      %s17 = sadd.s32 1, %s13
    $region7: #{tpu_custom_call.1} parent=1 // loop_footer_branch
      %12 = sbr.rel target = $region3
    $region8: #{tpu_custom_call.1} parent=1 // loop_exit
      _
    %1210 = vsyncpa [#allocation4], 1
    %s1211 = scalar_lea.sflag [#allocation4], 1
    %1212 = vsyncpa %s1211, 1

</llo_original>
